<compile_context>
chip_gen: v7x
topology: tpu7x:2x2x1
jax: 0.10.0
libtpu: 0.0.40
codegen_flags: <defaults>
</compile_context>

<pallas_src>
import functools

import jax
import jax.numpy as jnp
import numpy as np
from jax.experimental import pallas as pl
from jax.experimental.pallas import tpu as pltpu


def _min_euclid_kernel(x_ref, shp_ref, s2_ref, out_ref, *, W):
    """One grid step: TB samples x all channels x all shapelets.

    x_ref  : (C, TB, L_pad) f32  zero-padded raw series, channel-major
    shp_ref: (C, S, K)      f32  shapelets, transposed and pre-scaled by -2
    s2_ref : (C, K)         f32  per-(channel, shapelet) squared norm
    out_ref: (TB, K)        f32  min-over-windows of channel-summed L2 distance
    """
    C, TB, L_pad = x_ref.shape
    S, K = shp_ref.shape[1], shp_ref.shape[2]
    W_pad = L_pad - S + 1          # sublane-aligned (multiple of 8) window count
    M = TB * W_pad                 # matmul M dimension (all samples' windows)

    s2 = s2_ref[...]               # (C, K) grid-invariant, precomputed in wrapper

    acc = jnp.zeros((M, K), jnp.float32)
    for c in range(C):             # C is small -> static unroll
        xc = x_ref[c]              # (TB, L_pad)

        # In-kernel unfold: build the (M, S) window matrix using only lane
        # slices, sublane concats and a small 2-D transpose per sample.
        rows = []
        for t in range(TB):
            win_t = jnp.concatenate(
                [xc[t:t + 1, s:s + W_pad] for s in range(S)], axis=0)  # (S, W_pad)
            rows.append(win_t.T)                                       # (W_pad, S)
        xw = jnp.concatenate(rows, axis=0)                             # (M, S)

        # ||a - b||^2 = ||a||^2 + ||b||^2 - 2 a.b ; the -2 is folded into shp_ref.
        cross = jnp.dot(xw, shp_ref[c],
                        preferred_element_type=jnp.float32)            # (M, K) = -2 a.b
        x2 = jnp.sum(xw * xw, axis=-1, keepdims=True)                  # (M, 1)
        d2 = jnp.maximum(cross + x2 + s2[c:c + 1, :], 0.0)
        acc = acc + jnp.sqrt(d2)   # torch.sum(cdist, dim=1): sum of per-channel L2

    # Global min-pool over the W *valid* window positions of each sample
    # (rows w >= W are padding and are excluded by the static slice).
    mins = [jnp.min(acc[t * W_pad:t * W_pad + W, :], axis=0, keepdims=True)
            for t in range(TB)]
    out_ref[...] = jnp.concatenate(mins, axis=0)                       # (TB, K)


def min_euclidean_dist_block(x, shapelets, *, tb=8):
    """x: (N, C, L) float32, shapelets: (C, K, S) float32 -> (N, 1, K) float32."""
    N, C, L = x.shape
    Cs, K, S = shapelets.shape
    assert C == Cs
    W = L - S + 1
    assert W >= 1

    # Sample block per grid step: multiple of 8 (sublane tile) unless it covers
    # the whole (small) batch.  Keeps >=2 grid steps for large N (v7x megacore).
    if N <= tb:
        TB = N
    else:
        TB = max(8, (tb // 8) * 8)
    N_pad = ((N + TB - 1) // TB) * TB
    W_pad = ((W + 7) // 8) * 8
    L_pad = W_pad + S - 1

    x = x.astype(jnp.float32)
    xp = jnp.pad(x, ((0, N_pad - N), (0, 0), (0, L_pad - L)))
    # Channel-major so the kernel slices a clean (TB, L_pad) tile per channel.
    xt = jnp.transpose(xp, (1, 0, 2))                                  # (C, N_pad, L_pad)

    shp = shapelets.astype(jnp.float32)
    shp_neg2 = jnp.transpose(shp, (0, 2, 1)) * jnp.float32(-2.0)       # (C, S, K)
    s2 = jnp.sum(shp * shp, axis=-1)                                   # (C, K)

    grid = (N_pad // TB,)
    out = pl.pallas_call(
        functools.partial(_min_euclid_kernel, W=W),
        out_shape=jax.ShapeDtypeStruct((N_pad, K), jnp.float32),
        grid=grid,
        in_specs=[
            pl.BlockSpec((C, TB, L_pad), lambda n: (0, n, 0)),
            pl.BlockSpec((C, S, K), lambda n: (0, 0, 0)),
            pl.BlockSpec((C, K), lambda n: (0, 0)),
        ],
        out_specs=pl.BlockSpec((TB, K), lambda n: (n, 0)),
        compiler_params=pltpu.CompilerParams(
            dimension_semantics=("parallel",)),
    )(xt, shp_neg2, s2)

    return out[:N].reshape(N, 1, K)


def _reference(x, shapelets):
    """Pure-JAX reference matching the PyTorch forward exactly."""
    N, C, L = x.shape
    _, K, S = shapelets.shape
    W = L - S + 1
    idx = jnp.arange(W)[:, None] + jnp.arange(S)[None, :]
    xw = x[:, :, idx]                                                  # (N, C, W, S)
    diff = xw[:, :, :, None, :] - shapelets[None, :, None, :, :]       # (N, C, W, K, S)
    d = jnp.sqrt(jnp.sum(diff * diff, axis=-1))                        # (N, C, W, K)
    s = jnp.sum(d, axis=1, keepdims=True)                              # (N, 1, W, K)
    return jnp.min(jnp.swapaxes(s, 2, 3), axis=3)                      # (N, 1, K)


if __name__ == "__main__":
    key = jax.random.PRNGKey(0)
    # shapelets_size=8, num_shapelets=32, in_channels=4, batch=2, len_ts=16
    N, C, L = 2, 4, 16
    S, K = 8, 32

    kx, ks = jax.random.split(key)
    x = jax.random.normal(kx, (N, C, L), dtype=jnp.float32)
    # deterministic stand-in for torch.randn(in_channels, num_shapelets, shapelets_size)
    shapelets = jax.random.normal(ks, (C, K, S), dtype=jnp.float32)

    out = min_euclidean_dist_block(x, shapelets)
    out = jax.block_until_ready(out)

    assert out.shape == (N, 1, K)
    ref = _reference(x, shapelets)
    np.testing.assert_allclose(np.asarray(out), np.asarray(ref), rtol=1e-3, atol=1e-3)
    print("KERNEL_OK")
</pallas_src>

<mosaic_0001>
module attributes {stable_mosaic.version = 11 : i64} {
  func.func @_min_euclid_kernel(%arg0: i32, %arg1: memref<4x2x23xf32, #tpu.memory_space<vmem>>, %arg2: memref<4x8x32xf32, #tpu.memory_space<vmem>>, %arg3: memref<4x32xf32, #tpu.memory_space<vmem>>, %arg4: memref<2x32xf32, #tpu.memory_space<vmem>>) attributes {dimension_semantics = [#tpu.dimension_semantics<parallel>], iteration_bounds = array<i64: 1>, scalar_prefetch = 0 : i64, scratch_operands = 0 : i64, tpu.core_type = #tpu.core_type<tc>, window_params = [{transform_indices = @transform_0, window_bounds = array<i64: 4, 2, 23>}, {pipeline_mode = #tpu.pipeline_mode<synchronous>, transform_indices = @transform_1, window_bounds = array<i64: 4, 8, 32>}, {pipeline_mode = #tpu.pipeline_mode<synchronous>, transform_indices = @transform_2, window_bounds = array<i64: 4, 32>}, {transform_indices = @transform_3, window_bounds = array<i64: 2, 32>}]} {
    %c0 = arith.constant 0 : index
    %c0_0 = arith.constant 0 : index
    %0 = vector.load %arg3[%c0, %c0_0] : memref<4x32xf32, #tpu.memory_space<vmem>>, vector<4x32xf32>
    %cst = arith.constant 0.000000e+00 : f32
    %1 = vector.broadcast %cst : f32 to vector<32x32xf32>
    %c0_1 = arith.constant 0 : index
    %c0_2 = arith.constant 0 : index
    %c0_3 = arith.constant 0 : index
    %2 = vector.load %arg1[%c0_1, %c0_2, %c0_3] : memref<4x2x23xf32, #tpu.memory_space<vmem>>, vector<1x2x23xf32>
    %3 = vector.shape_cast %2 : vector<1x2x23xf32> to vector<2x23xf32>
    %4 = vector.extract_strided_slice %3 {offsets = [0, 0], sizes = [1, 16], strides = [1, 1]} : vector<2x23xf32> to vector<1x16xf32>
    %5 = vector.extract_strided_slice %3 {offsets = [0, 1], sizes = [1, 16], strides = [1, 1]} : vector<2x23xf32> to vector<1x16xf32>
    %6 = vector.extract_strided_slice %3 {offsets = [0, 2], sizes = [1, 16], strides = [1, 1]} : vector<2x23xf32> to vector<1x16xf32>
    %7 = vector.extract_strided_slice %3 {offsets = [0, 3], sizes = [1, 16], strides = [1, 1]} : vector<2x23xf32> to vector<1x16xf32>
    %8 = vector.extract_strided_slice %3 {offsets = [0, 4], sizes = [1, 16], strides = [1, 1]} : vector<2x23xf32> to vector<1x16xf32>
    %9 = vector.extract_strided_slice %3 {offsets = [0, 5], sizes = [1, 16], strides = [1, 1]} : vector<2x23xf32> to vector<1x16xf32>
    %10 = vector.extract_strided_slice %3 {offsets = [0, 6], sizes = [1, 16], strides = [1, 1]} : vector<2x23xf32> to vector<1x16xf32>
    %11 = vector.extract_strided_slice %3 {offsets = [0, 7], sizes = [1, 16], strides = [1, 1]} : vector<2x23xf32> to vector<1x16xf32>
    %12 = tpu.concatenate %4, %5, %6, %7, %8, %9, %10, %11 in 0 : vector<1x16xf32>, vector<1x16xf32>, vector<1x16xf32>, vector<1x16xf32>, vector<1x16xf32>, vector<1x16xf32>, vector<1x16xf32>, vector<1x16xf32> -> vector<8x16xf32>
    %13 = tpu.transpose %12, [1, 0] : vector<8x16xf32> -> vector<16x8xf32>
    %14 = vector.extract_strided_slice %3 {offsets = [1, 0], sizes = [1, 16], strides = [1, 1]} : vector<2x23xf32> to vector<1x16xf32>
    %15 = vector.extract_strided_slice %3 {offsets = [1, 1], sizes = [1, 16], strides = [1, 1]} : vector<2x23xf32> to vector<1x16xf32>
    %16 = vector.extract_strided_slice %3 {offsets = [1, 2], sizes = [1, 16], strides = [1, 1]} : vector<2x23xf32> to vector<1x16xf32>
    %17 = vector.extract_strided_slice %3 {offsets = [1, 3], sizes = [1, 16], strides = [1, 1]} : vector<2x23xf32> to vector<1x16xf32>
    %18 = vector.extract_strided_slice %3 {offsets = [1, 4], sizes = [1, 16], strides = [1, 1]} : vector<2x23xf32> to vector<1x16xf32>
    %19 = vector.extract_strided_slice %3 {offsets = [1, 5], sizes = [1, 16], strides = [1, 1]} : vector<2x23xf32> to vector<1x16xf32>
    %20 = vector.extract_strided_slice %3 {offsets = [1, 6], sizes = [1, 16], strides = [1, 1]} : vector<2x23xf32> to vector<1x16xf32>
    %21 = vector.extract_strided_slice %3 {offsets = [1, 7], sizes = [1, 16], strides = [1, 1]} : vector<2x23xf32> to vector<1x16xf32>
    %22 = tpu.concatenate %14, %15, %16, %17, %18, %19, %20, %21 in 0 : vector<1x16xf32>, vector<1x16xf32>, vector<1x16xf32>, vector<1x16xf32>, vector<1x16xf32>, vector<1x16xf32>, vector<1x16xf32>, vector<1x16xf32> -> vector<8x16xf32>
    %23 = tpu.transpose %22, [1, 0] : vector<8x16xf32> -> vector<16x8xf32>
    %24 = tpu.concatenate %13, %23 in 0 : vector<16x8xf32>, vector<16x8xf32> -> vector<32x8xf32>
    %c0_4 = arith.constant 0 : index
    %c0_5 = arith.constant 0 : index
    %c0_6 = arith.constant 0 : index
    %25 = vector.load %arg2[%c0_4, %c0_5, %c0_6] : memref<4x8x32xf32, #tpu.memory_space<vmem>>, vector<1x8x32xf32>
    %26 = vector.shape_cast %25 : vector<1x8x32xf32> to vector<8x32xf32>
    %cst_7 = arith.constant dense<0.000000e+00> : vector<32x32xf32>
    %27 = tpu.matmul %24, %26, %cst_7 {dimension_numbers = #tpu.dot_dimension_numbers<[1], [0], [0], [1], [0, 0, 1, 1], [], []>} : vector<32x8xf32>, vector<8x32xf32>, vector<32x32xf32> -> vector<32x32xf32>
    %28 = arith.mulf %24, %24 : vector<32x8xf32>
    %cst_8 = arith.constant dense<0.000000e+00> : vector<32xf32>
    %29 = vector.multi_reduction <add>, %28, %cst_8 [1] : vector<32x8xf32> to vector<32xf32>
    %30 = vector.shape_cast %29 : vector<32xf32> to vector<32x1xf32>
    %31 = vector.broadcast %30 : vector<32x1xf32> to vector<32x32xf32>
    %32 = arith.addf %27, %31 : vector<32x32xf32>
    %33 = vector.extract_strided_slice %0 {offsets = [0, 0], sizes = [1, 32], strides = [1, 1]} : vector<4x32xf32> to vector<1x32xf32>
    %34 = vector.broadcast %33 : vector<1x32xf32> to vector<32x32xf32>
    %35 = arith.addf %32, %34 : vector<32x32xf32>
    %cst_9 = arith.constant 0.000000e+00 : f32
    %36 = vector.broadcast %cst_9 : f32 to vector<32x32xf32>
    %37 = arith.maximumf %35, %36 : vector<32x32xf32>
    %38 = math.sqrt %37 : vector<32x32xf32>
    %39 = arith.addf %1, %38 : vector<32x32xf32>
    %c1 = arith.constant 1 : index
    %c0_10 = arith.constant 0 : index
    %c0_11 = arith.constant 0 : index
    %40 = vector.load %arg1[%c1, %c0_10, %c0_11] : memref<4x2x23xf32, #tpu.memory_space<vmem>>, vector<1x2x23xf32>
    %41 = vector.shape_cast %40 : vector<1x2x23xf32> to vector<2x23xf32>
    %42 = vector.extract_strided_slice %41 {offsets = [0, 0], sizes = [1, 16], strides = [1, 1]} : vector<2x23xf32> to vector<1x16xf32>
    %43 = vector.extract_strided_slice %41 {offsets = [0, 1], sizes = [1, 16], strides = [1, 1]} : vector<2x23xf32> to vector<1x16xf32>
    %44 = vector.extract_strided_slice %41 {offsets = [0, 2], sizes = [1, 16], strides = [1, 1]} : vector<2x23xf32> to vector<1x16xf32>
    %45 = vector.extract_strided_slice %41 {offsets = [0, 3], sizes = [1, 16], strides = [1, 1]} : vector<2x23xf32> to vector<1x16xf32>
    %46 = vector.extract_strided_slice %41 {offsets = [0, 4], sizes = [1, 16], strides = [1, 1]} : vector<2x23xf32> to vector<1x16xf32>
    %47 = vector.extract_strided_slice %41 {offsets = [0, 5], sizes = [1, 16], strides = [1, 1]} : vector<2x23xf32> to vector<1x16xf32>
    %48 = vector.extract_strided_slice %41 {offsets = [0, 6], sizes = [1, 16], strides = [1, 1]} : vector<2x23xf32> to vector<1x16xf32>
    %49 = vector.extract_strided_slice %41 {offsets = [0, 7], sizes = [1, 16], strides = [1, 1]} : vector<2x23xf32> to vector<1x16xf32>
    %50 = tpu.concatenate %42, %43, %44, %45, %46, %47, %48, %49 in 0 : vector<1x16xf32>, vector<1x16xf32>, vector<1x16xf32>, vector<1x16xf32>, vector<1x16xf32>, vector<1x16xf32>, vector<1x16xf32>, vector<1x16xf32> -> vector<8x16xf32>
    %51 = tpu.transpose %50, [1, 0] : vector<8x16xf32> -> vector<16x8xf32>
    %52 = vector.extract_strided_slice %41 {offsets = [1, 0], sizes = [1, 16], strides = [1, 1]} : vector<2x23xf32> to vector<1x16xf32>
    %53 = vector.extract_strided_slice %41 {offsets = [1, 1], sizes = [1, 16], strides = [1, 1]} : vector<2x23xf32> to vector<1x16xf32>
    %54 = vector.extract_strided_slice %41 {offsets = [1, 2], sizes = [1, 16], strides = [1, 1]} : vector<2x23xf32> to vector<1x16xf32>
    %55 = vector.extract_strided_slice %41 {offsets = [1, 3], sizes = [1, 16], strides = [1, 1]} : vector<2x23xf32> to vector<1x16xf32>
    %56 = vector.extract_strided_slice %41 {offsets = [1, 4], sizes = [1, 16], strides = [1, 1]} : vector<2x23xf32> to vector<1x16xf32>
    %57 = vector.extract_strided_slice %41 {offsets = [1, 5], sizes = [1, 16], strides = [1, 1]} : vector<2x23xf32> to vector<1x16xf32>
    %58 = vector.extract_strided_slice %41 {offsets = [1, 6], sizes = [1, 16], strides = [1, 1]} : vector<2x23xf32> to vector<1x16xf32>
    %59 = vector.extract_strided_slice %41 {offsets = [1, 7], sizes = [1, 16], strides = [1, 1]} : vector<2x23xf32> to vector<1x16xf32>
    %60 = tpu.concatenate %52, %53, %54, %55, %56, %57, %58, %59 in 0 : vector<1x16xf32>, vector<1x16xf32>, vector<1x16xf32>, vector<1x16xf32>, vector<1x16xf32>, vector<1x16xf32>, vector<1x16xf32>, vector<1x16xf32> -> vector<8x16xf32>
    %61 = tpu.transpose %60, [1, 0] : vector<8x16xf32> -> vector<16x8xf32>
    %62 = tpu.concatenate %51, %61 in 0 : vector<16x8xf32>, vector<16x8xf32> -> vector<32x8xf32>
    %c1_12 = arith.constant 1 : index
    %c0_13 = arith.constant 0 : index
    %c0_14 = arith.constant 0 : index
    %63 = vector.load %arg2[%c1_12, %c0_13, %c0_14] : memref<4x8x32xf32, #tpu.memory_space<vmem>>, vector<1x8x32xf32>
    %64 = vector.shape_cast %63 : vector<1x8x32xf32> to vector<8x32xf32>
    %cst_15 = arith.constant dense<0.000000e+00> : vector<32x32xf32>
    %65 = tpu.matmul %62, %64, %cst_15 {dimension_numbers = #tpu.dot_dimension_numbers<[1], [0], [0], [1], [0, 0, 1, 1], [], []>} : vector<32x8xf32>, vector<8x32xf32>, vector<32x32xf32> -> vector<32x32xf32>
    %66 = arith.mulf %62, %62 : vector<32x8xf32>
    %cst_16 = arith.constant dense<0.000000e+00> : vector<32xf32>
    %67 = vector.multi_reduction <add>, %66, %cst_16 [1] : vector<32x8xf32> to vector<32xf32>
    %68 = vector.shape_cast %67 : vector<32xf32> to vector<32x1xf32>
    %69 = vector.broadcast %68 : vector<32x1xf32> to vector<32x32xf32>
    %70 = arith.addf %65, %69 : vector<32x32xf32>
    %71 = vector.extract_strided_slice %0 {offsets = [1, 0], sizes = [1, 32], strides = [1, 1]} : vector<4x32xf32> to vector<1x32xf32>
    %72 = vector.broadcast %71 : vector<1x32xf32> to vector<32x32xf32>
    %73 = arith.addf %70, %72 : vector<32x32xf32>
    %cst_17 = arith.constant 0.000000e+00 : f32
    %74 = vector.broadcast %cst_17 : f32 to vector<32x32xf32>
    %75 = arith.maximumf %73, %74 : vector<32x32xf32>
    %76 = math.sqrt %75 : vector<32x32xf32>
    %77 = arith.addf %39, %76 : vector<32x32xf32>
    %c2 = arith.constant 2 : index
    %c0_18 = arith.constant 0 : index
    %c0_19 = arith.constant 0 : index
    %78 = vector.load %arg1[%c2, %c0_18, %c0_19] : memref<4x2x23xf32, #tpu.memory_space<vmem>>, vector<1x2x23xf32>
    %79 = vector.shape_cast %78 : vector<1x2x23xf32> to vector<2x23xf32>
    %80 = vector.extract_strided_slice %79 {offsets = [0, 0], sizes = [1, 16], strides = [1, 1]} : vector<2x23xf32> to vector<1x16xf32>
    %81 = vector.extract_strided_slice %79 {offsets = [0, 1], sizes = [1, 16], strides = [1, 1]} : vector<2x23xf32> to vector<1x16xf32>
    %82 = vector.extract_strided_slice %79 {offsets = [0, 2], sizes = [1, 16], strides = [1, 1]} : vector<2x23xf32> to vector<1x16xf32>
    %83 = vector.extract_strided_slice %79 {offsets = [0, 3], sizes = [1, 16], strides = [1, 1]} : vector<2x23xf32> to vector<1x16xf32>
    %84 = vector.extract_strided_slice %79 {offsets = [0, 4], sizes = [1, 16], strides = [1, 1]} : vector<2x23xf32> to vector<1x16xf32>
    %85 = vector.extract_strided_slice %79 {offsets = [0, 5], sizes = [1, 16], strides = [1, 1]} : vector<2x23xf32> to vector<1x16xf32>
    %86 = vector.extract_strided_slice %79 {offsets = [0, 6], sizes = [1, 16], strides = [1, 1]} : vector<2x23xf32> to vector<1x16xf32>
    %87 = vector.extract_strided_slice %79 {offsets = [0, 7], sizes = [1, 16], strides = [1, 1]} : vector<2x23xf32> to vector<1x16xf32>
    %88 = tpu.concatenate %80, %81, %82, %83, %84, %85, %86, %87 in 0 : vector<1x16xf32>, vector<1x16xf32>, vector<1x16xf32>, vector<1x16xf32>, vector<1x16xf32>, vector<1x16xf32>, vector<1x16xf32>, vector<1x16xf32> -> vector<8x16xf32>
    %89 = tpu.transpose %88, [1, 0] : vector<8x16xf32> -> vector<16x8xf32>
    %90 = vector.extract_strided_slice %79 {offsets = [1, 0], sizes = [1, 16], strides = [1, 1]} : vector<2x23xf32> to vector<1x16xf32>
    %91 = vector.extract_strided_slice %79 {offsets = [1, 1], sizes = [1, 16], strides = [1, 1]} : vector<2x23xf32> to vector<1x16xf32>
    %92 = vector.extract_strided_slice %79 {offsets = [1, 2], sizes = [1, 16], strides = [1, 1]} : vector<2x23xf32> to vector<1x16xf32>
    %93 = vector.extract_strided_slice %79 {offsets = [1, 3], sizes = [1, 16], strides = [1, 1]} : vector<2x23xf32> to vector<1x16xf32>
    %94 = vector.extract_strided_slice %79 {offsets = [1, 4], sizes = [1, 16], strides = [1, 1]} : vector<2x23xf32> to vector<1x16xf32>
    %95 = vector.extract_strided_slice %79 {offsets = [1, 5], sizes = [1, 16], strides = [1, 1]} : vector<2x23xf32> to vector<1x16xf32>
    %96 = vector.extract_strided_slice %79 {offsets = [1, 6], sizes = [1, 16], strides = [1, 1]} : vector<2x23xf32> to vector<1x16xf32>
    %97 = vector.extract_strided_slice %79 {offsets = [1, 7], sizes = [1, 16], strides = [1, 1]} : vector<2x23xf32> to vector<1x16xf32>
    %98 = tpu.concatenate %90, %91, %92, %93, %94, %95, %96, %97 in 0 : vector<1x16xf32>, vector<1x16xf32>, vector<1x16xf32>, vector<1x16xf32>, vector<1x16xf32>, vector<1x16xf32>, vector<1x16xf32>, vector<1x16xf32> -> vector<8x16xf32>
    %99 = tpu.transpose %98, [1, 0] : vector<8x16xf32> -> vector<16x8xf32>
    %100 = tpu.concatenate %89, %99 in 0 : vector<16x8xf32>, vector<16x8xf32> -> vector<32x8xf32>
    %c2_20 = arith.constant 2 : index
    %c0_21 = arith.constant 0 : index
    %c0_22 = arith.constant 0 : index
    %101 = vector.load %arg2[%c2_20, %c0_21, %c0_22] : memref<4x8x32xf32, #tpu.memory_space<vmem>>, vector<1x8x32xf32>
    %102 = vector.shape_cast %101 : vector<1x8x32xf32> to vector<8x32xf32>
    %cst_23 = arith.constant dense<0.000000e+00> : vector<32x32xf32>
    %103 = tpu.matmul %100, %102, %cst_23 {dimension_numbers = #tpu.dot_dimension_numbers<[1], [0], [0], [1], [0, 0, 1, 1], [], []>} : vector<32x8xf32>, vector<8x32xf32>, vector<32x32xf32> -> vector<32x32xf32>
    %104 = arith.mulf %100, %100 : vector<32x8xf32>
    %cst_24 = arith.constant dense<0.000000e+00> : vector<32xf32>
    %105 = vector.multi_reduction <add>, %104, %cst_24 [1] : vector<32x8xf32> to vector<32xf32>
    %106 = vector.shape_cast %105 : vector<32xf32> to vector<32x1xf32>
    %107 = vector.broadcast %106 : vector<32x1xf32> to vector<32x32xf32>
    %108 = arith.addf %103, %107 : vector<32x32xf32>
    %109 = vector.extract_strided_slice %0 {offsets = [2, 0], sizes = [1, 32], strides = [1, 1]} : vector<4x32xf32> to vector<1x32xf32>
    %110 = vector.broadcast %109 : vector<1x32xf32> to vector<32x32xf32>
    %111 = arith.addf %108, %110 : vector<32x32xf32>
    %cst_25 = arith.constant 0.000000e+00 : f32
    %112 = vector.broadcast %cst_25 : f32 to vector<32x32xf32>
    %113 = arith.maximumf %111, %112 : vector<32x32xf32>
    %114 = math.sqrt %113 : vector<32x32xf32>
    %115 = arith.addf %77, %114 : vector<32x32xf32>
    %c3 = arith.constant 3 : index
    %c0_26 = arith.constant 0 : index
    %c0_27 = arith.constant 0 : index
    %116 = vector.load %arg1[%c3, %c0_26, %c0_27] : memref<4x2x23xf32, #tpu.memory_space<vmem>>, vector<1x2x23xf32>
    %117 = vector.shape_cast %116 : vector<1x2x23xf32> to vector<2x23xf32>
    %118 = vector.extract_strided_slice %117 {offsets = [0, 0], sizes = [1, 16], strides = [1, 1]} : vector<2x23xf32> to vector<1x16xf32>
    %119 = vector.extract_strided_slice %117 {offsets = [0, 1], sizes = [1, 16], strides = [1, 1]} : vector<2x23xf32> to vector<1x16xf32>
    %120 = vector.extract_strided_slice %117 {offsets = [0, 2], sizes = [1, 16], strides = [1, 1]} : vector<2x23xf32> to vector<1x16xf32>
    %121 = vector.extract_strided_slice %117 {offsets = [0, 3], sizes = [1, 16], strides = [1, 1]} : vector<2x23xf32> to vector<1x16xf32>
    %122 = vector.extract_strided_slice %117 {offsets = [0, 4], sizes = [1, 16], strides = [1, 1]} : vector<2x23xf32> to vector<1x16xf32>
    %123 = vector.extract_strided_slice %117 {offsets = [0, 5], sizes = [1, 16], strides = [1, 1]} : vector<2x23xf32> to vector<1x16xf32>
    %124 = vector.extract_strided_slice %117 {offsets = [0, 6], sizes = [1, 16], strides = [1, 1]} : vector<2x23xf32> to vector<1x16xf32>
    %125 = vector.extract_strided_slice %117 {offsets = [0, 7], sizes = [1, 16], strides = [1, 1]} : vector<2x23xf32> to vector<1x16xf32>
    %126 = tpu.concatenate %118, %119, %120, %121, %122, %123, %124, %125 in 0 : vector<1x16xf32>, vector<1x16xf32>, vector<1x16xf32>, vector<1x16xf32>, vector<1x16xf32>, vector<1x16xf32>, vector<1x16xf32>, vector<1x16xf32> -> vector<8x16xf32>
    %127 = tpu.transpose %126, [1, 0] : vector<8x16xf32> -> vector<16x8xf32>
    %128 = vector.extract_strided_slice %117 {offsets = [1, 0], sizes = [1, 16], strides = [1, 1]} : vector<2x23xf32> to vector<1x16xf32>
    %129 = vector.extract_strided_slice %117 {offsets = [1, 1], sizes = [1, 16], strides = [1, 1]} : vector<2x23xf32> to vector<1x16xf32>
    %130 = vector.extract_strided_slice %117 {offsets = [1, 2], sizes = [1, 16], strides = [1, 1]} : vector<2x23xf32> to vector<1x16xf32>
    %131 = vector.extract_strided_slice %117 {offsets = [1, 3], sizes = [1, 16], strides = [1, 1]} : vector<2x23xf32> to vector<1x16xf32>
    %132 = vector.extract_strided_slice %117 {offsets = [1, 4], sizes = [1, 16], strides = [1, 1]} : vector<2x23xf32> to vector<1x16xf32>
    %133 = vector.extract_strided_slice %117 {offsets = [1, 5], sizes = [1, 16], strides = [1, 1]} : vector<2x23xf32> to vector<1x16xf32>
    %134 = vector.extract_strided_slice %117 {offsets = [1, 6], sizes = [1, 16], strides = [1, 1]} : vector<2x23xf32> to vector<1x16xf32>
    %135 = vector.extract_strided_slice %117 {offsets = [1, 7], sizes = [1, 16], strides = [1, 1]} : vector<2x23xf32> to vector<1x16xf32>
    %136 = tpu.concatenate %128, %129, %130, %131, %132, %133, %134, %135 in 0 : vector<1x16xf32>, vector<1x16xf32>, vector<1x16xf32>, vector<1x16xf32>, vector<1x16xf32>, vector<1x16xf32>, vector<1x16xf32>, vector<1x16xf32> -> vector<8x16xf32>
    %137 = tpu.transpose %136, [1, 0] : vector<8x16xf32> -> vector<16x8xf32>
    %138 = tpu.concatenate %127, %137 in 0 : vector<16x8xf32>, vector<16x8xf32> -> vector<32x8xf32>
    %c3_28 = arith.constant 3 : index
    %c0_29 = arith.constant 0 : index
    %c0_30 = arith.constant 0 : index
    %139 = vector.load %arg2[%c3_28, %c0_29, %c0_30] : memref<4x8x32xf32, #tpu.memory_space<vmem>>, vector<1x8x32xf32>
    %140 = vector.shape_cast %139 : vector<1x8x32xf32> to vector<8x32xf32>
    %cst_31 = arith.constant dense<0.000000e+00> : vector<32x32xf32>
    %141 = tpu.matmul %138, %140, %cst_31 {dimension_numbers = #tpu.dot_dimension_numbers<[1], [0], [0], [1], [0, 0, 1, 1], [], []>} : vector<32x8xf32>, vector<8x32xf32>, vector<32x32xf32> -> vector<32x32xf32>
    %142 = arith.mulf %138, %138 : vector<32x8xf32>
    %cst_32 = arith.constant dense<0.000000e+00> : vector<32xf32>
    %143 = vector.multi_reduction <add>, %142, %cst_32 [1] : vector<32x8xf32> to vector<32xf32>
    %144 = vector.shape_cast %143 : vector<32xf32> to vector<32x1xf32>
    %145 = vector.broadcast %144 : vector<32x1xf32> to vector<32x32xf32>
    %146 = arith.addf %141, %145 : vector<32x32xf32>
    %147 = vector.extract_strided_slice %0 {offsets = [3, 0], sizes = [1, 32], strides = [1, 1]} : vector<4x32xf32> to vector<1x32xf32>
    %148 = vector.broadcast %147 : vector<1x32xf32> to vector<32x32xf32>
    %149 = arith.addf %146, %148 : vector<32x32xf32>
    %cst_33 = arith.constant 0.000000e+00 : f32
    %150 = vector.broadcast %cst_33 : f32 to vector<32x32xf32>
    %151 = arith.maximumf %149, %150 : vector<32x32xf32>
    %152 = math.sqrt %151 : vector<32x32xf32>
    %153 = arith.addf %115, %152 : vector<32x32xf32>
    %154 = vector.extract_strided_slice %153 {offsets = [0, 0], sizes = [9, 32], strides = [1, 1]} : vector<32x32xf32> to vector<9x32xf32>
    %cst_34 = arith.constant dense<0x7F800000> : vector<32xf32>
    %155 = vector.multi_reduction <minimumf>, %154, %cst_34 [0] : vector<9x32xf32> to vector<32xf32>
    %156 = vector.shape_cast %155 : vector<32xf32> to vector<1x32xf32>
    %157 = vector.extract_strided_slice %153 {offsets = [16, 0], sizes = [9, 32], strides = [1, 1]} : vector<32x32xf32> to vector<9x32xf32>
    %cst_35 = arith.constant dense<0x7F800000> : vector<32xf32>
    %158 = vector.multi_reduction <minimumf>, %157, %cst_35 [0] : vector<9x32xf32> to vector<32xf32>
    %159 = vector.shape_cast %158 : vector<32xf32> to vector<1x32xf32>
    %160 = tpu.concatenate %156, %159 in 0 : vector<1x32xf32>, vector<1x32xf32> -> vector<2x32xf32>
    %c0_36 = arith.constant 0 : index
    %c0_37 = arith.constant 0 : index
    %161 = vector.load %arg4[%c0_36, %c0_37] : memref<2x32xf32, #tpu.memory_space<vmem>>, vector<2x32xf32>
    tpu.vector_store %arg4[%c0_36, %c0_37], %160 {strides = array<i32>} : memref<2x32xf32, #tpu.memory_space<vmem>>, vector<2x32xf32>,
    return
  }
  func.func @transform_0(%arg0: i32) -> (i32, i32, i32) {
    %c0_i32 = arith.constant 0 : i32
    %c0_i32_0 = arith.constant 0 : i32
    %c0_i32_1 = arith.constant 0 : i32
    return %c0_i32, %arg0, %c0_i32_0 : i32, i32, i32
  }
  func.func @transform_1(%arg0: i32) -> (i32, i32, i32) {
    %c0_i32 = arith.constant 0 : i32
    %c0_i32_0 = arith.constant 0 : i32
    %c0_i32_1 = arith.constant 0 : i32
    %c0_i32_2 = arith.constant 0 : i32
    return %c0_i32, %c0_i32_0, %c0_i32_1 : i32, i32, i32
  }
  func.func @transform_2(%arg0: i32) -> (i32, i32) {
    %c0_i32 = arith.constant 0 : i32
    %c0_i32_0 = arith.constant 0 : i32
    %c0_i32_1 = arith.constant 0 : i32
    return %c0_i32, %c0_i32_0 : i32, i32
  }
  func.func @transform_3(%arg0: i32) -> (i32, i32) {
    %c0_i32 = arith.constant 0 : i32
    %c0_i32_0 = arith.constant 0 : i32
    return %arg0, %c0_i32 : i32, i32
  }
}

</mosaic_0001>

<llo_original>
// kernel: tpu_custom_call.1
$region0: #{tpu_custom_call.1}
  #allocation0 [shape = 'u32[]', space=smem, size = 0x4, offset = 0x4, fixed_abs, tag = 'smem constant byte address 0x4 - core index']
  #allocation1 [shape = 'u32[144,128]{1,0:T(1,128)}', space=vmem, size = 0x12000, scoped, tag = 'internal scratch']
  %s0 = inlined_call_operand.hbm [shape: f32[4,2,23], index: 0, kind: input, shape index: {}]
  %s1 = inlined_call_operand.hbm [shape: f32[4,8,32], index: 1, kind: input, shape index: {}]
  %s2 = inlined_call_operand.vmem [shape: f32[4,32], index: 2, kind: input, shape index: {}]
  %s3 = inlined_call_operand.hbm [shape: f32[2,32], index: 3, kind: output, shape index: {}]
  %s4 = sld [smem:[#allocation0]]
  $region30: #{tpu_custom_call.1} parent=0
    _
  %s6 = ssub.s32 1, %s4
  %s7 = scalar_select 0, %s6, %s4
  $region1: #{tpu_custom_call.1} parent=0
    #allocation2 [shape = 'u8[4096]{0}', space=vmem, size = 0x1000, scoped, tag = 'input window, operand 0, single buffered']
    #allocation3 [shape = 's32[1]{0}', space=sflag, size = 0x4, scoped, tag = 'scoped memory for tpu_custom_call.1']
    #allocation4 [shape = 's32[1]{0}', space=sflag, size = 0x4, scoped, tag = 'scoped memory for tpu_custom_call.1']
    #allocation5 [shape = 'u8[16384]{0}', space=vmem, size = 0x4000, scoped, tag = 'input window, operand 1, single buffered']
    #allocation6 [shape = 's32[1]{0}', space=sflag, size = 0x4, scoped, tag = 'scoped memory for tpu_custom_call.1']
    #allocation7 [shape = 'u8[1024]{0}', space=vmem, size = 0x400, scoped, tag = 'output window, operand 0, single buffered']
    %8 = vsyncpa [#allocation3], 0
    %9 = vsyncpa [#allocation6], 0
    %10 = vsyncpa [#allocation4], 0
    // Predicated region
    $region2: #{tpu_custom_call.1} parent=1 // pred_check
      _
    $region3: #{tpu_custom_call.1} parent=1 // pred_check_branch
      %12 = sbr.rel (0) target = $region5
    $region4: #{tpu_custom_call.1} parent=1 // pred_region
      %s14 = ssub.s32 128, 128
      %15 = vsyncadd [#allocation3], %s14
      %s16 = sshll.u32 [#allocation2], 4
      %s17 = int_to_ptr.vmem [resolvable:$true] %s16
      %22 = dma.hbm_to_vmem [thread:$0]  %s0, 128, %s17, [#allocation3], 32, 32, 2
    $region5: #{tpu_custom_call.1} parent=1 // pred_fallthru
      _
    // Predicated region
    $region6: #{tpu_custom_call.1} parent=1 // pred_check
      _
    $region7: #{tpu_custom_call.1} parent=1 // pred_check_branch
      %24 = sbr.rel (0) target = $region9
    $region8: #{tpu_custom_call.1} parent=1 // pred_region
      %s26 = ssub.s32 512, 512
      %27 = vsyncadd [#allocation6], %s26
      %s28 = sshll.u32 [#allocation5], 4
      %s29 = int_to_ptr.vmem [resolvable:$true] %s28
      %34 = dma.hbm_to_vmem [thread:$0]  %s1, 512, %s29, [#allocation6], 128, 128, 8
    $region9: #{tpu_custom_call.1} parent=1 // pred_fallthru
      _
    // Predicated region
    $region10: #{tpu_custom_call.1} parent=1 // pred_check
      _
    $region11: #{tpu_custom_call.1} parent=1 // pred_check_branch
      %36 = sbr.rel (0) target = $region13
    $region12: #{tpu_custom_call.1} parent=1 // pred_region
      _
    $region13: #{tpu_custom_call.1} parent=1 // pred_fallthru
      _
    // Predicated region
    $region14: #{tpu_custom_call.1} parent=1 // pred_check
      _
    $region15: #{tpu_custom_call.1} parent=1 // pred_check_branch
      %38 = sbr.rel (0) target = $region17
    $region16: #{tpu_custom_call.1} parent=1 // pred_region
      %39 = dma.done [#allocation3], 128
    $region17: #{tpu_custom_call.1} parent=1 // pred_fallthru
      _
    // Predicated region
    $region18: #{tpu_custom_call.1} parent=1 // pred_check
      _
    $region19: #{tpu_custom_call.1} parent=1 // pred_check_branch
      %41 = sbr.rel (0) target = $region21
    $region20: #{tpu_custom_call.1} parent=1 // pred_region
      %42 = dma.done [#allocation6], 512
    $region21: #{tpu_custom_call.1} parent=1 // pred_fallthru
      _
    %v43 = vld [vmem:[%s2] sm:$0xf]
    %v44 = vld [vmem:[#allocation2] sm:$0x3]
    %v46 = vrot.slane %v44, 7
    %47 = vrot.lane.b32.xlu0 %v46, 127
    %v48 = vpop.permute.xlu0 %47
    %v50 = vrot.slane %v44, 6
    %51 = vrot.lane.b32.xlu0 %v50, 126
    %v52 = vpop.permute.xlu0 %51
    %v54 = vrot.slane %v44, 5
    %55 = vrot.lane.b32.xlu0 %v54, 125
    %v56 = vpop.permute.xlu0 %55
    %v58 = vrot.slane %v44, 4
    %59 = vrot.lane.b32.xlu0 %v58, 124
    %v60 = vpop.permute.xlu0 %59
    %v62 = vrot.slane %v44, 3
    %63 = vrot.lane.b32.xlu0 %v62, 123
    %v64 = vpop.permute.xlu0 %63
    %v66 = vrot.slane %v44, 2
    %67 = vrot.lane.b32.xlu0 %v66, 122
    %v68 = vpop.permute.xlu0 %67
    %v70 = vrot.slane %v44, 1
    %71 = vrot.lane.b32.xlu0 %v70, 121
    %v72 = vpop.permute.xlu0 %71
    %vm74 = vcmask 1040384
    %v75 = vsel %vm74, %v44, %v48
    %vm76 = vcmask 1041408
    %v77 = vsel %vm76, %v75, %v52
    %vm78 = vcmask 1042432
    %v79 = vsel %vm78, %v77, %v56
    %vm80 = vcmask 1043456
    %v81 = vsel %vm80, %v79, %v60
    %vm82 = vcmask 1044480
    %v83 = vsel %vm82, %v81, %v64
    %vm84 = vcmask 1045504
    %v85 = vsel %vm84, %v83, %v68
    %vm86 = vcmask 1046528
    %v87 = vsel %vm86, %v85, %v72
    %88 = vxpose.xlu0.b32.start [1/16] %v87, 128
    %89 = vxpose.xlu0.b32.cont [2/16] 0.0, 128
    %90 = vxpose.xlu0.b32.cont [3/16] 0.0, 128
    %91 = vxpose.xlu0.b32.cont [4/16] 0.0, 128
    %92 = vxpose.xlu0.b32.cont [5/16] 0.0, 128
    %93 = vxpose.xlu0.b32.cont [6/16] 0.0, 128
    %94 = vxpose.xlu0.b32.cont [7/16] 0.0, 128
    %95 = vxpose.xlu0.b32.cont [8/16] 0.0, 128
    %96 = vxpose.xlu0.b32.cont [9/16] 0.0, 128
    %97 = vxpose.xlu0.b32.cont [10/16] 0.0, 128
    %98 = vxpose.xlu0.b32.cont [11/16] 0.0, 128
    %99 = vxpose.xlu0.b32.cont [12/16] 0.0, 128
    %100 = vxpose.xlu0.b32.cont [13/16] 0.0, 128
    %101 = vxpose.xlu0.b32.cont [14/16] 0.0, 128
    %102 = vxpose.xlu0.b32.cont [15/16] 0.0, 128
    %103 = vxpose.xlu0.b32.end [16/16] 0.0, 128
    %v104 = vpop.trf.xlu0
    %v105 = vpop.trf.xlu0
    %v106 = vpop.trf.xlu0
    %v107 = vpop.trf.xlu0
    %v108 = vpop.trf.xlu0
    %v109 = vpop.trf.xlu0
    %v110 = vpop.trf.xlu0
    %v111 = vpop.trf.xlu0
    %v112 = vpop.trf.xlu0
    %v113 = vpop.trf.xlu0
    %v114 = vpop.trf.xlu0
    %v115 = vpop.trf.xlu0
    %v116 = vpop.trf.xlu0
    %v117 = vpop.trf.xlu0
    %v118 = vpop.trf.xlu0
    %v119 = vpop.trf.xlu0
    %121 = vrot.lane.b32.xlu0 %v44, 127
    %v122 = vpop.permute.xlu0 %121
    %124 = vrot.lane.b32.xlu0 %v46, 126
    %v125 = vpop.permute.xlu0 %124
    %127 = vrot.lane.b32.xlu0 %v50, 125
    %v128 = vpop.permute.xlu0 %127
    %130 = vrot.lane.b32.xlu0 %v54, 124
    %v131 = vpop.permute.xlu0 %130
    %133 = vrot.lane.b32.xlu0 %v58, 123
    %v134 = vpop.permute.xlu0 %133
    %136 = vrot.lane.b32.xlu0 %v62, 122
    %v137 = vpop.permute.xlu0 %136
    %139 = vrot.lane.b32.xlu0 %v66, 121
    %v140 = vpop.permute.xlu0 %139
    %v142 = vsel %vm74, %v70, %v122
    %v143 = vsel %vm76, %v142, %v125
    %v144 = vsel %vm78, %v143, %v128
    %v145 = vsel %vm80, %v144, %v131
    %v146 = vsel %vm82, %v145, %v134
    %v147 = vsel %vm84, %v146, %v137
    %v148 = vsel %vm86, %v147, %v140
    %149 = vxpose.xlu0.b32.start [1/16] %v148, 128
    %150 = vxpose.xlu0.b32.cont [2/16] 0.0, 128
    %151 = vxpose.xlu0.b32.cont [3/16] 0.0, 128
    %152 = vxpose.xlu0.b32.cont [4/16] 0.0, 128
    %153 = vxpose.xlu0.b32.cont [5/16] 0.0, 128
    %154 = vxpose.xlu0.b32.cont [6/16] 0.0, 128
    %155 = vxpose.xlu0.b32.cont [7/16] 0.0, 128
    %156 = vxpose.xlu0.b32.cont [8/16] 0.0, 128
    %157 = vxpose.xlu0.b32.cont [9/16] 0.0, 128
    %158 = vxpose.xlu0.b32.cont [10/16] 0.0, 128
    %159 = vxpose.xlu0.b32.cont [11/16] 0.0, 128
    %160 = vxpose.xlu0.b32.cont [12/16] 0.0, 128
    %161 = vxpose.xlu0.b32.cont [13/16] 0.0, 128
    %162 = vxpose.xlu0.b32.cont [14/16] 0.0, 128
    %163 = vxpose.xlu0.b32.cont [15/16] 0.0, 128
    %164 = vxpose.xlu0.b32.end [16/16] 0.0, 128
    %v165 = vpop.trf.xlu0
    %v166 = vpop.trf.xlu0
    %v167 = vpop.trf.xlu0
    %v168 = vpop.trf.xlu0
    %v169 = vpop.trf.xlu0
    %v170 = vpop.trf.xlu0
    %v171 = vpop.trf.xlu0
    %v172 = vpop.trf.xlu0
    %v173 = vpop.trf.xlu0
    %v174 = vpop.trf.xlu0
    %v175 = vpop.trf.xlu0
    %v176 = vpop.trf.xlu0
    %v177 = vpop.trf.xlu0
    %v178 = vpop.trf.xlu0
    %v179 = vpop.trf.xlu0
    %v180 = vpop.trf.xlu0
    %v181 = vld [vmem:[#allocation5] sm:$0xff]
    %v182 = vmul.f32 %v104, %v104
    %v183 = vmul.f32 %v105, %v105
    %v184 = vmul.f32 %v165, %v165
    %v185 = vmul.f32 %v166, %v166
    %vm186 = vcmask 64512
    %v187 = vsel %vm186, %v182, 0.0
    %188 = vadd.xlane.f32.xlu0 %v187
    %v189 = vpop.xlane.xlu0 %188
    %v190 = vsel %vm186, %v183, 0.0
    %191 = vadd.xlane.f32.xlu0 %v190
    %v192 = vpop.xlane.xlu0 %191
    %v193 = vsel %vm186, %v184, 0.0
    %194 = vadd.xlane.f32.xlu0 %v193
    %v195 = vpop.xlane.xlu0 %194
    %v196 = vsel %vm186, %v185, 0.0
    %197 = vadd.xlane.f32.xlu0 %v196
    %v198 = vpop.xlane.xlu0 %197
    %v200 = vsel %vm186, %v104, 0
    %v203 = vsel %vm186, %v105, 0
    %v206 = vsel %vm186, %v165, 0
    %v209 = vsel %vm186, %v166, 0
    %211 = vmatprep.subr.mxu0 0.0
    %212 = vmatpush1.msra.mxu0 %v181
    %213 = vmatprep.subr.mxu0 0.0
    %214 = vmatpush1.msra.mxu0 0.0
    %215 = vmatprep.subr.mxu0 0.0
    %216 = vmatpush1.msra.mxu0 0.0
    %217 = vmatprep.subr.mxu0 0.0
    %218 = vmatpush1.msra.mxu0 0.0
    %219 = vmatprep.subr.mxu0 0.0
    %220 = vmatpush1.msra.mxu0 0.0
    %221 = vmatprep.subr.mxu0 0.0
    %222 = vmatpush1.msra.mxu0 0.0
    %223 = vmatprep.subr.mxu0 0.0
    %224 = vmatpush1.msra.mxu0 0.0
    %225 = vmatprep.subr.mxu0 0.0
    %226 = vmatpush1.msra.mxu0 0.0
    %227 = vmatprep.subr.mxu0 0.0
    %228 = vmatpush1.msra.mxu0 0.0
    %229 = vmatprep.subr.mxu0 0.0
    %230 = vmatpush1.msra.mxu0 0.0
    %231 = vmatprep.subr.mxu0 0.0
    %232 = vmatpush1.msra.mxu0 0.0
    %233 = vmatprep.subr.mxu0 0.0
    %234 = vmatpush1.msra.mxu0 0.0
    %235 = vmatprep.subr.mxu0 0.0
    %236 = vmatpush1.msra.mxu0 0.0
    %237 = vmatprep.subr.mxu0 0.0
    %238 = vmatpush1.msra.mxu0 0.0
    %239 = vmatprep.subr.mxu0 0.0
    %240 = vmatpush1.msra.mxu0 0.0
    %241 = vmatprep.subr.mxu0 0.0
    %242 = vmatpush1.msra.mxu0 0.0
    %243 = vmatprep.subr.mxu0 0.0
    %244 = vmatpush1.msra.mxu0 0.0
    %245 = vmatprep.subr.mxu0 0.0
    %246 = vmatpush1.msra.mxu0 0.0
    %247 = vmatprep.subr.mxu0 0.0
    %248 = vmatpush1.msra.mxu0 0.0
    %249 = vmatprep.subr.mxu0 0.0
    %250 = vmatpush1.msra.mxu0 0.0
    %251 = vmatprep.subr.mxu0 0.0
    %252 = vmatpush1.msra.mxu0 0.0
    %253 = vmatprep.subr.mxu0 0.0
    %254 = vmatpush1.msra.mxu0 0.0
    %255 = vmatprep.subr.mxu0 0.0
    %256 = vmatpush1.msra.mxu0 0.0
    %257 = vmatprep.subr.mxu0 0.0
    %258 = vmatpush1.msra.mxu0 0.0
    %259 = vmatprep.subr.mxu0 0.0
    %260 = vmatpush1.msra.mxu0 0.0
    %261 = vmatprep.subr.mxu0 0.0
    %262 = vmatpush1.msra.mxu0 0.0
    %263 = vmatprep.subr.mxu0 0.0
    %264 = vmatpush1.msra.mxu0 0.0
    %265 = vmatprep.subr.mxu0 0.0
    %266 = vmatpush1.msra.mxu0 0.0
    %267 = vmatprep.subr.mxu0 0.0
    %268 = vmatpush1.msra.mxu0 0.0
    %269 = vmatprep.subr.mxu0 0.0
    %270 = vmatpush1.msra.mxu0 0.0
    %271 = vmatprep.subr.mxu0 0.0
    %272 = vmatpush1.msra.mxu0 0.0
    %273 = vmatprep.subr.mxu0 0.0
    %274 = vmatpush1.msra.mxu0 0.0
    %275 = vmatprep.mubr.f32.mxu0 0.0
    %276 = vmatmul.mubr.f32.gmra.mrb[0].mxu0 %v200
    %v277 = vpop.f32.mrb[0].mxu0
    %v278 = vadd.f32 %v189, %v277
    %v279 = vpop.f32.mrb[0].mxu0
    %280 = vmatprep.mubr.f32.mxu0 0.0
    %281 = vmatmul.mubr.f32.gmra.mrb[0].mxu0 %v203
    %v282 = vpop.f32.mrb[0].mxu0
    %v283 = vadd.f32 %v192, %v282
    %v284 = vpop.f32.mrb[0].mxu0
    %285 = vmatprep.mubr.f32.mxu0 0.0
    %286 = vmatmul.mubr.f32.gmra.mrb[0].mxu0 %v206
    %v287 = vpop.f32.mrb[0].mxu0
    %v288 = vadd.f32 %v195, %v287
    %v289 = vpop.f32.mrb[0].mxu0
    %290 = vmatprep.mubr.f32.mxu0 0.0
    %291 = vmatmul.mubr.f32.gmra.mrb[0].mxu0 %v209
    %v292 = vpop.f32.mrb[0].mxu0
    %v293 = vadd.f32 %v198, %v292
    %v294 = vpop.f32.mrb[0].mxu0
    %295 = vdwg.mxu0
    %v296 = vlaneseq
    %v297 = vshrl.u32 %v296, 7
    %v298 = vsub.s32 0, %v297
    %v299 = vrot.slane %v43, %v298
    %v300 = vadd.f32 %v278, %v299
    %v301 = vadd.f32 %v283, %v299
    %v302 = vadd.f32 %v288, %v299
    %v303 = vadd.f32 %v293, %v299
    %v304 = vmax.f32 %v300, 0.0
    %v305 = vmax.f32 %v301, 0.0
    %v306 = vmax.f32 %v302, 0.0
    %v307 = vmax.f32 %v303, 0.0
    %v308 = vrsqrt.pop %v304
    %v309 = vmul.f32 %v304, %v308
    %vm310 = vcmp.eq.f32.partialorder %v304, inf
    %v311 = vsel %vm310, %v304, %v309
    %vm312 = vcmp.eq.f32.partialorder %v304, 0.0
    %v313 = vand.u32 %v304, 2147483648
    %v314 = vsel %vm312, %v313, %v311
    %v315 = vrsqrt.pop %v305
    %v316 = vmul.f32 %v305, %v315
    %vm317 = vcmp.eq.f32.partialorder %v305, inf
    %v318 = vsel %vm317, %v305, %v316
    %vm319 = vcmp.eq.f32.partialorder %v305, 0.0
    %v320 = vand.u32 %v305, 2147483648
    %v321 = vsel %vm319, %v320, %v318
    %v322 = vrsqrt.pop %v306
    %v323 = vmul.f32 %v306, %v322
    %vm324 = vcmp.eq.f32.partialorder %v306, inf
    %v325 = vsel %vm324, %v306, %v323
    %vm326 = vcmp.eq.f32.partialorder %v306, 0.0
    %v327 = vand.u32 %v306, 2147483648
    %v328 = vsel %vm326, %v327, %v325
    %v329 = vrsqrt.pop %v307
    %v330 = vmul.f32 %v307, %v329
    %vm331 = vcmp.eq.f32.partialorder %v307, inf
    %v332 = vsel %vm331, %v307, %v330
    %vm333 = vcmp.eq.f32.partialorder %v307, 0.0
    %v334 = vand.u32 %v307, 2147483648
    %v335 = vsel %vm333, %v334, %v332
    %v336 = vadd.f32 %v314, 0.0
    %v337 = vadd.f32 %v321, 0.0
    %v338 = vadd.f32 %v328, 0.0
    %v339 = vadd.f32 %v335, 0.0
    %s340 = scalar_lea.vmem [#allocation2], 2
    %v341 = vld [vmem:[%s340] sm:$0x3]
    %v343 = vrot.slane %v341, 7
    %344 = vrot.lane.b32.xlu0 %v343, 127
    %v345 = vpop.permute.xlu0 %344
    %v347 = vrot.slane %v341, 6
    %348 = vrot.lane.b32.xlu0 %v347, 126
    %v349 = vpop.permute.xlu0 %348
    %v351 = vrot.slane %v341, 5
    %352 = vrot.lane.b32.xlu0 %v351, 125
    %v353 = vpop.permute.xlu0 %352
    %v355 = vrot.slane %v341, 4
    %356 = vrot.lane.b32.xlu0 %v355, 124
    %v357 = vpop.permute.xlu0 %356
    %v359 = vrot.slane %v341, 3
    %360 = vrot.lane.b32.xlu0 %v359, 123
    %v361 = vpop.permute.xlu0 %360
    %v363 = vrot.slane %v341, 2
    %364 = vrot.lane.b32.xlu0 %v363, 122
    %v365 = vpop.permute.xlu0 %364
    %v367 = vrot.slane %v341, 1
    %368 = vrot.lane.b32.xlu0 %v367, 121
    %v369 = vpop.permute.xlu0 %368
    %v371 = vsel %vm74, %v341, %v345
    %v372 = vsel %vm76, %v371, %v349
    %v373 = vsel %vm78, %v372, %v353
    %v374 = vsel %vm80, %v373, %v357
    %v375 = vsel %vm82, %v374, %v361
    %v376 = vsel %vm84, %v375, %v365
    %v377 = vsel %vm86, %v376, %v369
    %378 = vxpose.xlu0.b32.start [1/16] %v377, 128
    %379 = vxpose.xlu0.b32.cont [2/16] 0.0, 128
    %380 = vxpose.xlu0.b32.cont [3/16] 0.0, 128
    %381 = vxpose.xlu0.b32.cont [4/16] 0.0, 128
    %382 = vxpose.xlu0.b32.cont [5/16] 0.0, 128
    %383 = vxpose.xlu0.b32.cont [6/16] 0.0, 128
    %384 = vxpose.xlu0.b32.cont [7/16] 0.0, 128
    %385 = vxpose.xlu0.b32.cont [8/16] 0.0, 128
    %386 = vxpose.xlu0.b32.cont [9/16] 0.0, 128
    %387 = vxpose.xlu0.b32.cont [10/16] 0.0, 128
    %388 = vxpose.xlu0.b32.cont [11/16] 0.0, 128
    %389 = vxpose.xlu0.b32.cont [12/16] 0.0, 128
    %390 = vxpose.xlu0.b32.cont [13/16] 0.0, 128
    %391 = vxpose.xlu0.b32.cont [14/16] 0.0, 128
    %392 = vxpose.xlu0.b32.cont [15/16] 0.0, 128
    %393 = vxpose.xlu0.b32.end [16/16] 0.0, 128
    %v394 = vpop.trf.xlu0
    %v395 = vpop.trf.xlu0
    %v396 = vpop.trf.xlu0
    %v397 = vpop.trf.xlu0
    %v398 = vpop.trf.xlu0
    %v399 = vpop.trf.xlu0
    %v400 = vpop.trf.xlu0
    %v401 = vpop.trf.xlu0
    %v402 = vpop.trf.xlu0
    %v403 = vpop.trf.xlu0
    %v404 = vpop.trf.xlu0
    %v405 = vpop.trf.xlu0
    %v406 = vpop.trf.xlu0
    %v407 = vpop.trf.xlu0
    %v408 = vpop.trf.xlu0
    %v409 = vpop.trf.xlu0
    %411 = vrot.lane.b32.xlu0 %v341, 127
    %v412 = vpop.permute.xlu0 %411
    %414 = vrot.lane.b32.xlu0 %v343, 126
    %v415 = vpop.permute.xlu0 %414
    %417 = vrot.lane.b32.xlu0 %v347, 125
    %v418 = vpop.permute.xlu0 %417
    %420 = vrot.lane.b32.xlu0 %v351, 124
    %v421 = vpop.permute.xlu0 %420
    %423 = vrot.lane.b32.xlu0 %v355, 123
    %v424 = vpop.permute.xlu0 %423
    %426 = vrot.lane.b32.xlu0 %v359, 122
    %v427 = vpop.permute.xlu0 %426
    %429 = vrot.lane.b32.xlu0 %v363, 121
    %v430 = vpop.permute.xlu0 %429
    %v432 = vsel %vm74, %v367, %v412
    %v433 = vsel %vm76, %v432, %v415
    %v434 = vsel %vm78, %v433, %v418
    %v435 = vsel %vm80, %v434, %v421
    %v436 = vsel %vm82, %v435, %v424
    %v437 = vsel %vm84, %v436, %v427
    %v438 = vsel %vm86, %v437, %v430
    %439 = vxpose.xlu0.b32.start [1/16] %v438, 128
    %440 = vxpose.xlu0.b32.cont [2/16] 0.0, 128
    %441 = vxpose.xlu0.b32.cont [3/16] 0.0, 128
    %442 = vxpose.xlu0.b32.cont [4/16] 0.0, 128
    %443 = vxpose.xlu0.b32.cont [5/16] 0.0, 128
    %444 = vxpose.xlu0.b32.cont [6/16] 0.0, 128
    %445 = vxpose.xlu0.b32.cont [7/16] 0.0, 128
    %446 = vxpose.xlu0.b32.cont [8/16] 0.0, 128
    %447 = vxpose.xlu0.b32.cont [9/16] 0.0, 128
    %448 = vxpose.xlu0.b32.cont [10/16] 0.0, 128
    %449 = vxpose.xlu0.b32.cont [11/16] 0.0, 128
    %450 = vxpose.xlu0.b32.cont [12/16] 0.0, 128
    %451 = vxpose.xlu0.b32.cont [13/16] 0.0, 128
    %452 = vxpose.xlu0.b32.cont [14/16] 0.0, 128
    %453 = vxpose.xlu0.b32.cont [15/16] 0.0, 128
    %454 = vxpose.xlu0.b32.end [16/16] 0.0, 128
    %v455 = vpop.trf.xlu0
    %v456 = vpop.trf.xlu0
    %v457 = vpop.trf.xlu0
    %v458 = vpop.trf.xlu0
    %v459 = vpop.trf.xlu0
    %v460 = vpop.trf.xlu0
    %v461 = vpop.trf.xlu0
    %v462 = vpop.trf.xlu0
    %v463 = vpop.trf.xlu0
    %v464 = vpop.trf.xlu0
    %v465 = vpop.trf.xlu0
    %v466 = vpop.trf.xlu0
    %v467 = vpop.trf.xlu0
    %v468 = vpop.trf.xlu0
    %v469 = vpop.trf.xlu0
    %v470 = vpop.trf.xlu0
    %s471 = scalar_lea.vmem [#allocation5], 8
    %v472 = vld [vmem:[%s471] sm:$0xff]
    %v473 = vmul.f32 %v394, %v394
    %v474 = vmul.f32 %v395, %v395
    %v475 = vmul.f32 %v455, %v455
    %v476 = vmul.f32 %v456, %v456
    %v477 = vsel %vm186, %v473, 0.0
    %478 = vadd.xlane.f32.xlu0 %v477
    %v479 = vpop.xlane.xlu0 %478
    %v480 = vsel %vm186, %v474, 0.0
    %481 = vadd.xlane.f32.xlu0 %v480
    %v482 = vpop.xlane.xlu0 %481
    %v483 = vsel %vm186, %v475, 0.0
    %484 = vadd.xlane.f32.xlu0 %v483
    %v485 = vpop.xlane.xlu0 %484
    %v486 = vsel %vm186, %v476, 0.0
    %487 = vadd.xlane.f32.xlu0 %v486
    %v488 = vpop.xlane.xlu0 %487
    %v490 = vsel %vm186, %v394, 0
    %v493 = vsel %vm186, %v395, 0
    %v496 = vsel %vm186, %v455, 0
    %v499 = vsel %vm186, %v456, 0
    %501 = vmatprep.subr.mxu0 0.0
    %502 = vmatpush1.msra.mxu0 %v472
    %503 = vmatprep.subr.mxu0 0.0
    %504 = vmatpush1.msra.mxu0 0.0
    %505 = vmatprep.subr.mxu0 0.0
    %506 = vmatpush1.msra.mxu0 0.0
    %507 = vmatprep.subr.mxu0 0.0
    %508 = vmatpush1.msra.mxu0 0.0
    %509 = vmatprep.subr.mxu0 0.0
    %510 = vmatpush1.msra.mxu0 0.0
    %511 = vmatprep.subr.mxu0 0.0
    %512 = vmatpush1.msra.mxu0 0.0
    %513 = vmatprep.subr.mxu0 0.0
    %514 = vmatpush1.msra.mxu0 0.0
    %515 = vmatprep.subr.mxu0 0.0
    %516 = vmatpush1.msra.mxu0 0.0
    %517 = vmatprep.subr.mxu0 0.0
    %518 = vmatpush1.msra.mxu0 0.0
    %519 = vmatprep.subr.mxu0 0.0
    %520 = vmatpush1.msra.mxu0 0.0
    %521 = vmatprep.subr.mxu0 0.0
    %522 = vmatpush1.msra.mxu0 0.0
    %523 = vmatprep.subr.mxu0 0.0
    %524 = vmatpush1.msra.mxu0 0.0
    %525 = vmatprep.subr.mxu0 0.0
    %526 = vmatpush1.msra.mxu0 0.0
    %527 = vmatprep.subr.mxu0 0.0
    %528 = vmatpush1.msra.mxu0 0.0
    %529 = vmatprep.subr.mxu0 0.0
    %530 = vmatpush1.msra.mxu0 0.0
    %531 = vmatprep.subr.mxu0 0.0
    %532 = vmatpush1.msra.mxu0 0.0
    %533 = vmatprep.subr.mxu0 0.0
    %534 = vmatpush1.msra.mxu0 0.0
    %535 = vmatprep.subr.mxu0 0.0
    %536 = vmatpush1.msra.mxu0 0.0
    %537 = vmatprep.subr.mxu0 0.0
    %538 = vmatpush1.msra.mxu0 0.0
    %539 = vmatprep.subr.mxu0 0.0
    %540 = vmatpush1.msra.mxu0 0.0
    %541 = vmatprep.subr.mxu0 0.0
    %542 = vmatpush1.msra.mxu0 0.0
    %543 = vmatprep.subr.mxu0 0.0
    %544 = vmatpush1.msra.mxu0 0.0
    %545 = vmatprep.subr.mxu0 0.0
    %546 = vmatpush1.msra.mxu0 0.0
    %547 = vmatprep.subr.mxu0 0.0
    %548 = vmatpush1.msra.mxu0 0.0
    %549 = vmatprep.subr.mxu0 0.0
    %550 = vmatpush1.msra.mxu0 0.0
    %551 = vmatprep.subr.mxu0 0.0
    %552 = vmatpush1.msra.mxu0 0.0
    %553 = vmatprep.subr.mxu0 0.0
    %554 = vmatpush1.msra.mxu0 0.0
    %555 = vmatprep.subr.mxu0 0.0
    %556 = vmatpush1.msra.mxu0 0.0
    %557 = vmatprep.subr.mxu0 0.0
    %558 = vmatpush1.msra.mxu0 0.0
    %559 = vmatprep.subr.mxu0 0.0
    %560 = vmatpush1.msra.mxu0 0.0
    %561 = vmatprep.subr.mxu0 0.0
    %562 = vmatpush1.msra.mxu0 0.0
    %563 = vmatprep.subr.mxu0 0.0
    %564 = vmatpush1.msra.mxu0 0.0
    %565 = vmatprep.mubr.f32.mxu0 0.0
    %566 = vmatmul.mubr.f32.gmra.mrb[0].mxu0 %v490
    %v567 = vpop.f32.mrb[0].mxu0
    %v568 = vadd.f32 %v479, %v567
    %v569 = vpop.f32.mrb[0].mxu0
    %570 = vmatprep.mubr.f32.mxu0 0.0
    %571 = vmatmul.mubr.f32.gmra.mrb[0].mxu0 %v493
    %v572 = vpop.f32.mrb[0].mxu0
    %v573 = vadd.f32 %v482, %v572
    %v574 = vpop.f32.mrb[0].mxu0
    %575 = vmatprep.mubr.f32.mxu0 0.0
    %576 = vmatmul.mubr.f32.gmra.mrb[0].mxu0 %v496
    %v577 = vpop.f32.mrb[0].mxu0
    %v578 = vadd.f32 %v485, %v577
    %v579 = vpop.f32.mrb[0].mxu0
    %580 = vmatprep.mubr.f32.mxu0 0.0
    %581 = vmatmul.mubr.f32.gmra.mrb[0].mxu0 %v499
    %v582 = vpop.f32.mrb[0].mxu0
    %v583 = vadd.f32 %v488, %v582
    %v584 = vpop.f32.mrb[0].mxu0
    %585 = vdwg.mxu0
    %v586 = vlaneseq
    %v587 = vshrl.u32 %v586, 7
    %v588 = vsub.s32 1, %v587
    %v589 = vrot.slane %v43, %v588
    %v590 = vadd.f32 %v568, %v589
    %v591 = vadd.f32 %v573, %v589
    %v592 = vadd.f32 %v578, %v589
    %v593 = vadd.f32 %v583, %v589
    %v594 = vmax.f32 %v590, 0.0
    %v595 = vmax.f32 %v591, 0.0
    %v596 = vmax.f32 %v592, 0.0
    %v597 = vmax.f32 %v593, 0.0
    %v598 = vrsqrt.pop %v594
    %v599 = vmul.f32 %v594, %v598
    %vm600 = vcmp.eq.f32.partialorder %v594, inf
    %v601 = vsel %vm600, %v594, %v599
    %vm602 = vcmp.eq.f32.partialorder %v594, 0.0
    %v603 = vand.u32 %v594, 2147483648
    %v604 = vsel %vm602, %v603, %v601
    %v605 = vrsqrt.pop %v595
    %v606 = vmul.f32 %v595, %v605
    %vm607 = vcmp.eq.f32.partialorder %v595, inf
    %v608 = vsel %vm607, %v595, %v606
    %vm609 = vcmp.eq.f32.partialorder %v595, 0.0
    %v610 = vand.u32 %v595, 2147483648
    %v611 = vsel %vm609, %v610, %v608
    %v612 = vrsqrt.pop %v596
    %v613 = vmul.f32 %v596, %v612
    %vm614 = vcmp.eq.f32.partialorder %v596, inf
    %v615 = vsel %vm614, %v596, %v613
    %vm616 = vcmp.eq.f32.partialorder %v596, 0.0
    %v617 = vand.u32 %v596, 2147483648
    %v618 = vsel %vm616, %v617, %v615
    %v619 = vrsqrt.pop %v597
    %v620 = vmul.f32 %v597, %v619
    %vm621 = vcmp.eq.f32.partialorder %v597, inf
    %v622 = vsel %vm621, %v597, %v620
    %vm623 = vcmp.eq.f32.partialorder %v597, 0.0
    %v624 = vand.u32 %v597, 2147483648
    %v625 = vsel %vm623, %v624, %v622
    %v626 = vadd.f32 %v336, %v604
    %v627 = vadd.f32 %v337, %v611
    %v628 = vadd.f32 %v338, %v618
    %v629 = vadd.f32 %v339, %v625
    %s630 = scalar_lea.vmem [#allocation2], 4
    %v631 = vld [vmem:[%s630] sm:$0x3]
    %v633 = vrot.slane %v631, 7
    %634 = vrot.lane.b32.xlu0 %v633, 127
    %v635 = vpop.permute.xlu0 %634
    %v637 = vrot.slane %v631, 6
    %638 = vrot.lane.b32.xlu0 %v637, 126
    %v639 = vpop.permute.xlu0 %638
    %v641 = vrot.slane %v631, 5
    %642 = vrot.lane.b32.xlu0 %v641, 125
    %v643 = vpop.permute.xlu0 %642
    %v645 = vrot.slane %v631, 4
    %646 = vrot.lane.b32.xlu0 %v645, 124
    %v647 = vpop.permute.xlu0 %646
    %v649 = vrot.slane %v631, 3
    %650 = vrot.lane.b32.xlu0 %v649, 123
    %v651 = vpop.permute.xlu0 %650
    %v653 = vrot.slane %v631, 2
    %654 = vrot.lane.b32.xlu0 %v653, 122
    %v655 = vpop.permute.xlu0 %654
    %v657 = vrot.slane %v631, 1
    %658 = vrot.lane.b32.xlu0 %v657, 121
    %v659 = vpop.permute.xlu0 %658
    %v661 = vsel %vm74, %v631, %v635
    %v662 = vsel %vm76, %v661, %v639
    %v663 = vsel %vm78, %v662, %v643
    %v664 = vsel %vm80, %v663, %v647
    %v665 = vsel %vm82, %v664, %v651
    %v666 = vsel %vm84, %v665, %v655
    %v667 = vsel %vm86, %v666, %v659
    %668 = vxpose.xlu0.b32.start [1/16] %v667, 128
    %669 = vxpose.xlu0.b32.cont [2/16] 0.0, 128
    %670 = vxpose.xlu0.b32.cont [3/16] 0.0, 128
    %671 = vxpose.xlu0.b32.cont [4/16] 0.0, 128
    %672 = vxpose.xlu0.b32.cont [5/16] 0.0, 128
    %673 = vxpose.xlu0.b32.cont [6/16] 0.0, 128
    %674 = vxpose.xlu0.b32.cont [7/16] 0.0, 128
    %675 = vxpose.xlu0.b32.cont [8/16] 0.0, 128
    %676 = vxpose.xlu0.b32.cont [9/16] 0.0, 128
    %677 = vxpose.xlu0.b32.cont [10/16] 0.0, 128
    %678 = vxpose.xlu0.b32.cont [11/16] 0.0, 128
    %679 = vxpose.xlu0.b32.cont [12/16] 0.0, 128
    %680 = vxpose.xlu0.b32.cont [13/16] 0.0, 128
    %681 = vxpose.xlu0.b32.cont [14/16] 0.0, 128
    %682 = vxpose.xlu0.b32.cont [15/16] 0.0, 128
    %683 = vxpose.xlu0.b32.end [16/16] 0.0, 128
    %v684 = vpop.trf.xlu0
    %v685 = vpop.trf.xlu0
    %v686 = vpop.trf.xlu0
    %v687 = vpop.trf.xlu0
    %v688 = vpop.trf.xlu0
    %v689 = vpop.trf.xlu0
    %v690 = vpop.trf.xlu0
    %v691 = vpop.trf.xlu0
    %v692 = vpop.trf.xlu0
    %v693 = vpop.trf.xlu0
    %v694 = vpop.trf.xlu0
    %v695 = vpop.trf.xlu0
    %v696 = vpop.trf.xlu0
    %v697 = vpop.trf.xlu0
    %v698 = vpop.trf.xlu0
    %v699 = vpop.trf.xlu0
    %701 = vrot.lane.b32.xlu0 %v631, 127
    %v702 = vpop.permute.xlu0 %701
    %704 = vrot.lane.b32.xlu0 %v633, 126
    %v705 = vpop.permute.xlu0 %704
    %707 = vrot.lane.b32.xlu0 %v637, 125
    %v708 = vpop.permute.xlu0 %707
    %710 = vrot.lane.b32.xlu0 %v641, 124
    %v711 = vpop.permute.xlu0 %710
    %713 = vrot.lane.b32.xlu0 %v645, 123
    %v714 = vpop.permute.xlu0 %713
    %716 = vrot.lane.b32.xlu0 %v649, 122
    %v717 = vpop.permute.xlu0 %716
    %719 = vrot.lane.b32.xlu0 %v653, 121
    %v720 = vpop.permute.xlu0 %719
    %v722 = vsel %vm74, %v657, %v702
    %v723 = vsel %vm76, %v722, %v705
    %v724 = vsel %vm78, %v723, %v708
    %v725 = vsel %vm80, %v724, %v711
    %v726 = vsel %vm82, %v725, %v714
    %v727 = vsel %vm84, %v726, %v717
    %v728 = vsel %vm86, %v727, %v720
    %729 = vxpose.xlu0.b32.start [1/16] %v728, 128
    %730 = vxpose.xlu0.b32.cont [2/16] 0.0, 128
    %731 = vxpose.xlu0.b32.cont [3/16] 0.0, 128
    %732 = vxpose.xlu0.b32.cont [4/16] 0.0, 128
    %733 = vxpose.xlu0.b32.cont [5/16] 0.0, 128
    %734 = vxpose.xlu0.b32.cont [6/16] 0.0, 128
    %735 = vxpose.xlu0.b32.cont [7/16] 0.0, 128
    %736 = vxpose.xlu0.b32.cont [8/16] 0.0, 128
    %737 = vxpose.xlu0.b32.cont [9/16] 0.0, 128
    %738 = vxpose.xlu0.b32.cont [10/16] 0.0, 128
    %739 = vxpose.xlu0.b32.cont [11/16] 0.0, 128
    %740 = vxpose.xlu0.b32.cont [12/16] 0.0, 128
    %741 = vxpose.xlu0.b32.cont [13/16] 0.0, 128
    %742 = vxpose.xlu0.b32.cont [14/16] 0.0, 128
    %743 = vxpose.xlu0.b32.cont [15/16] 0.0, 128
    %744 = vxpose.xlu0.b32.end [16/16] 0.0, 128
    %v745 = vpop.trf.xlu0
    %v746 = vpop.trf.xlu0
    %v747 = vpop.trf.xlu0
    %v748 = vpop.trf.xlu0
    %v749 = vpop.trf.xlu0
    %v750 = vpop.trf.xlu0
    %v751 = vpop.trf.xlu0
    %v752 = vpop.trf.xlu0
    %v753 = vpop.trf.xlu0
    %v754 = vpop.trf.xlu0
    %v755 = vpop.trf.xlu0
    %v756 = vpop.trf.xlu0
    %v757 = vpop.trf.xlu0
    %v758 = vpop.trf.xlu0
    %v759 = vpop.trf.xlu0
    %v760 = vpop.trf.xlu0
    %s761 = scalar_lea.vmem [#allocation5], 16
    %v762 = vld [vmem:[%s761] sm:$0xff]
    %v763 = vmul.f32 %v684, %v684
    %v764 = vmul.f32 %v685, %v685
    %v765 = vmul.f32 %v745, %v745
    %v766 = vmul.f32 %v746, %v746
    %v767 = vsel %vm186, %v763, 0.0
    %768 = vadd.xlane.f32.xlu0 %v767
    %v769 = vpop.xlane.xlu0 %768
    %v770 = vsel %vm186, %v764, 0.0
    %771 = vadd.xlane.f32.xlu0 %v770
    %v772 = vpop.xlane.xlu0 %771
    %v773 = vsel %vm186, %v765, 0.0
    %774 = vadd.xlane.f32.xlu0 %v773
    %v775 = vpop.xlane.xlu0 %774
    %v776 = vsel %vm186, %v766, 0.0
    %777 = vadd.xlane.f32.xlu0 %v776
    %v778 = vpop.xlane.xlu0 %777
    %v780 = vsel %vm186, %v684, 0
    %v783 = vsel %vm186, %v685, 0
    %v786 = vsel %vm186, %v745, 0
    %v789 = vsel %vm186, %v746, 0
    %791 = vmatprep.subr.mxu0 0.0
    %792 = vmatpush1.msra.mxu0 %v762
    %793 = vmatprep.subr.mxu0 0.0
    %794 = vmatpush1.msra.mxu0 0.0
    %795 = vmatprep.subr.mxu0 0.0
    %796 = vmatpush1.msra.mxu0 0.0
    %797 = vmatprep.subr.mxu0 0.0
    %798 = vmatpush1.msra.mxu0 0.0
    %799 = vmatprep.subr.mxu0 0.0
    %800 = vmatpush1.msra.mxu0 0.0
    %801 = vmatprep.subr.mxu0 0.0
    %802 = vmatpush1.msra.mxu0 0.0
    %803 = vmatprep.subr.mxu0 0.0
    %804 = vmatpush1.msra.mxu0 0.0
    %805 = vmatprep.subr.mxu0 0.0
    %806 = vmatpush1.msra.mxu0 0.0
    %807 = vmatprep.subr.mxu0 0.0
    %808 = vmatpush1.msra.mxu0 0.0
    %809 = vmatprep.subr.mxu0 0.0
    %810 = vmatpush1.msra.mxu0 0.0
    %811 = vmatprep.subr.mxu0 0.0
    %812 = vmatpush1.msra.mxu0 0.0
    %813 = vmatprep.subr.mxu0 0.0
    %814 = vmatpush1.msra.mxu0 0.0
    %815 = vmatprep.subr.mxu0 0.0
    %816 = vmatpush1.msra.mxu0 0.0
    %817 = vmatprep.subr.mxu0 0.0
    %818 = vmatpush1.msra.mxu0 0.0
    %819 = vmatprep.subr.mxu0 0.0
    %820 = vmatpush1.msra.mxu0 0.0
    %821 = vmatprep.subr.mxu0 0.0
    %822 = vmatpush1.msra.mxu0 0.0
    %823 = vmatprep.subr.mxu0 0.0
    %824 = vmatpush1.msra.mxu0 0.0
    %825 = vmatprep.subr.mxu0 0.0
    %826 = vmatpush1.msra.mxu0 0.0
    %827 = vmatprep.subr.mxu0 0.0
    %828 = vmatpush1.msra.mxu0 0.0
    %829 = vmatprep.subr.mxu0 0.0
    %830 = vmatpush1.msra.mxu0 0.0
    %831 = vmatprep.subr.mxu0 0.0
    %832 = vmatpush1.msra.mxu0 0.0
    %833 = vmatprep.subr.mxu0 0.0
    %834 = vmatpush1.msra.mxu0 0.0
    %835 = vmatprep.subr.mxu0 0.0
    %836 = vmatpush1.msra.mxu0 0.0
    %837 = vmatprep.subr.mxu0 0.0
    %838 = vmatpush1.msra.mxu0 0.0
    %839 = vmatprep.subr.mxu0 0.0
    %840 = vmatpush1.msra.mxu0 0.0
    %841 = vmatprep.subr.mxu0 0.0
    %842 = vmatpush1.msra.mxu0 0.0
    %843 = vmatprep.subr.mxu0 0.0
    %844 = vmatpush1.msra.mxu0 0.0
    %845 = vmatprep.subr.mxu0 0.0
    %846 = vmatpush1.msra.mxu0 0.0
    %847 = vmatprep.subr.mxu0 0.0
    %848 = vmatpush1.msra.mxu0 0.0
    %849 = vmatprep.subr.mxu0 0.0
    %850 = vmatpush1.msra.mxu0 0.0
    %851 = vmatprep.subr.mxu0 0.0
    %852 = vmatpush1.msra.mxu0 0.0
    %853 = vmatprep.subr.mxu0 0.0
    %854 = vmatpush1.msra.mxu0 0.0
    %855 = vmatprep.mubr.f32.mxu0 0.0
    %856 = vmatmul.mubr.f32.gmra.mrb[0].mxu0 %v780
    %v857 = vpop.f32.mrb[0].mxu0
    %v858 = vadd.f32 %v769, %v857
    %v859 = vpop.f32.mrb[0].mxu0
    %860 = vmatprep.mubr.f32.mxu0 0.0
    %861 = vmatmul.mubr.f32.gmra.mrb[0].mxu0 %v783
    %v862 = vpop.f32.mrb[0].mxu0
    %v863 = vadd.f32 %v772, %v862
    %v864 = vpop.f32.mrb[0].mxu0
    %865 = vmatprep.mubr.f32.mxu0 0.0
    %866 = vmatmul.mubr.f32.gmra.mrb[0].mxu0 %v786
    %v867 = vpop.f32.mrb[0].mxu0
    %v868 = vadd.f32 %v775, %v867
    %v869 = vpop.f32.mrb[0].mxu0
    %870 = vmatprep.mubr.f32.mxu0 0.0
    %871 = vmatmul.mubr.f32.gmra.mrb[0].mxu0 %v789
    %v872 = vpop.f32.mrb[0].mxu0
    %v873 = vadd.f32 %v778, %v872
    %v874 = vpop.f32.mrb[0].mxu0
    %875 = vdwg.mxu0
    %v876 = vlaneseq
    %v877 = vshrl.u32 %v876, 7
    %v878 = vsub.s32 2, %v877
    %v879 = vrot.slane %v43, %v878
    %v880 = vadd.f32 %v858, %v879
    %v881 = vadd.f32 %v863, %v879
    %v882 = vadd.f32 %v868, %v879
    %v883 = vadd.f32 %v873, %v879
    %v884 = vmax.f32 %v880, 0.0
    %v885 = vmax.f32 %v881, 0.0
    %v886 = vmax.f32 %v882, 0.0
    %v887 = vmax.f32 %v883, 0.0
    %v888 = vrsqrt.pop %v884
    %v889 = vmul.f32 %v884, %v888
    %vm890 = vcmp.eq.f32.partialorder %v884, inf
    %v891 = vsel %vm890, %v884, %v889
    %vm892 = vcmp.eq.f32.partialorder %v884, 0.0
    %v893 = vand.u32 %v884, 2147483648
    %v894 = vsel %vm892, %v893, %v891
    %v895 = vrsqrt.pop %v885
    %v896 = vmul.f32 %v885, %v895
    %vm897 = vcmp.eq.f32.partialorder %v885, inf
    %v898 = vsel %vm897, %v885, %v896
    %vm899 = vcmp.eq.f32.partialorder %v885, 0.0
    %v900 = vand.u32 %v885, 2147483648
    %v901 = vsel %vm899, %v900, %v898
    %v902 = vrsqrt.pop %v886
    %v903 = vmul.f32 %v886, %v902
    %vm904 = vcmp.eq.f32.partialorder %v886, inf
    %v905 = vsel %vm904, %v886, %v903
    %vm906 = vcmp.eq.f32.partialorder %v886, 0.0
    %v907 = vand.u32 %v886, 2147483648
    %v908 = vsel %vm906, %v907, %v905
    %v909 = vrsqrt.pop %v887
    %v910 = vmul.f32 %v887, %v909
    %vm911 = vcmp.eq.f32.partialorder %v887, inf
    %v912 = vsel %vm911, %v887, %v910
    %vm913 = vcmp.eq.f32.partialorder %v887, 0.0
    %v914 = vand.u32 %v887, 2147483648
    %v915 = vsel %vm913, %v914, %v912
    %v916 = vadd.f32 %v626, %v894
    %v917 = vadd.f32 %v627, %v901
    %v918 = vadd.f32 %v628, %v908
    %v919 = vadd.f32 %v629, %v915
    %s920 = scalar_lea.vmem [#allocation2], 6
    %v921 = vld [vmem:[%s920] sm:$0x3]
    %v923 = vrot.slane %v921, 7
    %924 = vrot.lane.b32.xlu0 %v923, 127
    %v925 = vpop.permute.xlu0 %924
    %v927 = vrot.slane %v921, 6
    %928 = vrot.lane.b32.xlu0 %v927, 126
    %v929 = vpop.permute.xlu0 %928
    %v931 = vrot.slane %v921, 5
    %932 = vrot.lane.b32.xlu0 %v931, 125
    %v933 = vpop.permute.xlu0 %932
    %v935 = vrot.slane %v921, 4
    %936 = vrot.lane.b32.xlu0 %v935, 124
    %v937 = vpop.permute.xlu0 %936
    %v939 = vrot.slane %v921, 3
    %940 = vrot.lane.b32.xlu0 %v939, 123
    %v941 = vpop.permute.xlu0 %940
    %v943 = vrot.slane %v921, 2
    %944 = vrot.lane.b32.xlu0 %v943, 122
    %v945 = vpop.permute.xlu0 %944
    %v947 = vrot.slane %v921, 1
    %948 = vrot.lane.b32.xlu0 %v947, 121
    %v949 = vpop.permute.xlu0 %948
    %v951 = vsel %vm74, %v921, %v925
    %v952 = vsel %vm76, %v951, %v929
    %v953 = vsel %vm78, %v952, %v933
    %v954 = vsel %vm80, %v953, %v937
    %v955 = vsel %vm82, %v954, %v941
    %v956 = vsel %vm84, %v955, %v945
    %v957 = vsel %vm86, %v956, %v949
    %958 = vxpose.xlu0.b32.start [1/16] %v957, 128
    %959 = vxpose.xlu0.b32.cont [2/16] 0.0, 128
    %960 = vxpose.xlu0.b32.cont [3/16] 0.0, 128
    %961 = vxpose.xlu0.b32.cont [4/16] 0.0, 128
    %962 = vxpose.xlu0.b32.cont [5/16] 0.0, 128
    %963 = vxpose.xlu0.b32.cont [6/16] 0.0, 128
    %964 = vxpose.xlu0.b32.cont [7/16] 0.0, 128
    %965 = vxpose.xlu0.b32.cont [8/16] 0.0, 128
    %966 = vxpose.xlu0.b32.cont [9/16] 0.0, 128
    %967 = vxpose.xlu0.b32.cont [10/16] 0.0, 128
    %968 = vxpose.xlu0.b32.cont [11/16] 0.0, 128
    %969 = vxpose.xlu0.b32.cont [12/16] 0.0, 128
    %970 = vxpose.xlu0.b32.cont [13/16] 0.0, 128
    %971 = vxpose.xlu0.b32.cont [14/16] 0.0, 128
    %972 = vxpose.xlu0.b32.cont [15/16] 0.0, 128
    %973 = vxpose.xlu0.b32.end [16/16] 0.0, 128
    %v974 = vpop.trf.xlu0
    %v975 = vpop.trf.xlu0
    %v976 = vpop.trf.xlu0
    %v977 = vpop.trf.xlu0
    %v978 = vpop.trf.xlu0
    %v979 = vpop.trf.xlu0
    %v980 = vpop.trf.xlu0
    %v981 = vpop.trf.xlu0
    %v982 = vpop.trf.xlu0
    %v983 = vpop.trf.xlu0
    %v984 = vpop.trf.xlu0
    %v985 = vpop.trf.xlu0
    %v986 = vpop.trf.xlu0
    %v987 = vpop.trf.xlu0
    %v988 = vpop.trf.xlu0
    %v989 = vpop.trf.xlu0
    %991 = vrot.lane.b32.xlu0 %v921, 127
    %v992 = vpop.permute.xlu0 %991
    %994 = vrot.lane.b32.xlu0 %v923, 126
    %v995 = vpop.permute.xlu0 %994
    %997 = vrot.lane.b32.xlu0 %v927, 125
    %v998 = vpop.permute.xlu0 %997
    %1000 = vrot.lane.b32.xlu0 %v931, 124
    %v1001 = vpop.permute.xlu0 %1000
    %1003 = vrot.lane.b32.xlu0 %v935, 123
    %v1004 = vpop.permute.xlu0 %1003
    %1006 = vrot.lane.b32.xlu0 %v939, 122
    %v1007 = vpop.permute.xlu0 %1006
    %1009 = vrot.lane.b32.xlu0 %v943, 121
    %v1010 = vpop.permute.xlu0 %1009
    %v1012 = vsel %vm74, %v947, %v992
    %v1013 = vsel %vm76, %v1012, %v995
    %v1014 = vsel %vm78, %v1013, %v998
    %v1015 = vsel %vm80, %v1014, %v1001
    %v1016 = vsel %vm82, %v1015, %v1004
    %v1017 = vsel %vm84, %v1016, %v1007
    %v1018 = vsel %vm86, %v1017, %v1010
    %1019 = vxpose.xlu0.b32.start [1/16] %v1018, 128
    %1020 = vxpose.xlu0.b32.cont [2/16] 0.0, 128
    %1021 = vxpose.xlu0.b32.cont [3/16] 0.0, 128
    %1022 = vxpose.xlu0.b32.cont [4/16] 0.0, 128
    %1023 = vxpose.xlu0.b32.cont [5/16] 0.0, 128
    %1024 = vxpose.xlu0.b32.cont [6/16] 0.0, 128
    %1025 = vxpose.xlu0.b32.cont [7/16] 0.0, 128
    %1026 = vxpose.xlu0.b32.cont [8/16] 0.0, 128
    %1027 = vxpose.xlu0.b32.cont [9/16] 0.0, 128
    %1028 = vxpose.xlu0.b32.cont [10/16] 0.0, 128
    %1029 = vxpose.xlu0.b32.cont [11/16] 0.0, 128
    %1030 = vxpose.xlu0.b32.cont [12/16] 0.0, 128
    %1031 = vxpose.xlu0.b32.cont [13/16] 0.0, 128
    %1032 = vxpose.xlu0.b32.cont [14/16] 0.0, 128
    %1033 = vxpose.xlu0.b32.cont [15/16] 0.0, 128
    %1034 = vxpose.xlu0.b32.end [16/16] 0.0, 128
    %v1035 = vpop.trf.xlu0
    %v1036 = vpop.trf.xlu0
    %v1037 = vpop.trf.xlu0
    %v1038 = vpop.trf.xlu0
    %v1039 = vpop.trf.xlu0
    %v1040 = vpop.trf.xlu0
    %v1041 = vpop.trf.xlu0
    %v1042 = vpop.trf.xlu0
    %v1043 = vpop.trf.xlu0
    %v1044 = vpop.trf.xlu0
    %v1045 = vpop.trf.xlu0
    %v1046 = vpop.trf.xlu0
    %v1047 = vpop.trf.xlu0
    %v1048 = vpop.trf.xlu0
    %v1049 = vpop.trf.xlu0
    %v1050 = vpop.trf.xlu0
    %s1051 = scalar_lea.vmem [#allocation5], 24
    %v1052 = vld [vmem:[%s1051] sm:$0xff]
    %v1053 = vmul.f32 %v974, %v974
    %v1054 = vmul.f32 %v975, %v975
    %v1055 = vmul.f32 %v1035, %v1035
    %v1056 = vmul.f32 %v1036, %v1036
    %v1057 = vsel %vm186, %v1053, 0.0
    %1058 = vadd.xlane.f32.xlu0 %v1057
    %v1059 = vpop.xlane.xlu0 %1058
    %v1060 = vsel %vm186, %v1054, 0.0
    %1061 = vadd.xlane.f32.xlu0 %v1060
    %v1062 = vpop.xlane.xlu0 %1061
    %v1063 = vsel %vm186, %v1055, 0.0
    %1064 = vadd.xlane.f32.xlu0 %v1063
    %v1065 = vpop.xlane.xlu0 %1064
    %v1066 = vsel %vm186, %v1056, 0.0
    %1067 = vadd.xlane.f32.xlu0 %v1066
    %v1068 = vpop.xlane.xlu0 %1067
    %v1070 = vsel %vm186, %v974, 0
    %v1073 = vsel %vm186, %v975, 0
    %v1076 = vsel %vm186, %v1035, 0
    %v1079 = vsel %vm186, %v1036, 0
    %1081 = vmatprep.subr.mxu0 0.0
    %1082 = vmatpush1.msra.mxu0 %v1052
    %1083 = vmatprep.subr.mxu0 0.0
    %1084 = vmatpush1.msra.mxu0 0.0
    %1085 = vmatprep.subr.mxu0 0.0
    %1086 = vmatpush1.msra.mxu0 0.0
    %1087 = vmatprep.subr.mxu0 0.0
    %1088 = vmatpush1.msra.mxu0 0.0
    %1089 = vmatprep.subr.mxu0 0.0
    %1090 = vmatpush1.msra.mxu0 0.0
    %1091 = vmatprep.subr.mxu0 0.0
    %1092 = vmatpush1.msra.mxu0 0.0
    %1093 = vmatprep.subr.mxu0 0.0
    %1094 = vmatpush1.msra.mxu0 0.0
    %1095 = vmatprep.subr.mxu0 0.0
    %1096 = vmatpush1.msra.mxu0 0.0
    %1097 = vmatprep.subr.mxu0 0.0
    %1098 = vmatpush1.msra.mxu0 0.0
    %1099 = vmatprep.subr.mxu0 0.0
    %1100 = vmatpush1.msra.mxu0 0.0
    %1101 = vmatprep.subr.mxu0 0.0
    %1102 = vmatpush1.msra.mxu0 0.0
    %1103 = vmatprep.subr.mxu0 0.0
    %1104 = vmatpush1.msra.mxu0 0.0
    %1105 = vmatprep.subr.mxu0 0.0
    %1106 = vmatpush1.msra.mxu0 0.0
    %1107 = vmatprep.subr.mxu0 0.0
    %1108 = vmatpush1.msra.mxu0 0.0
    %1109 = vmatprep.subr.mxu0 0.0
    %1110 = vmatpush1.msra.mxu0 0.0
    %1111 = vmatprep.subr.mxu0 0.0
    %1112 = vmatpush1.msra.mxu0 0.0
    %1113 = vmatprep.subr.mxu0 0.0
    %1114 = vmatpush1.msra.mxu0 0.0
    %1115 = vmatprep.subr.mxu0 0.0
    %1116 = vmatpush1.msra.mxu0 0.0
    %1117 = vmatprep.subr.mxu0 0.0
    %1118 = vmatpush1.msra.mxu0 0.0
    %1119 = vmatprep.subr.mxu0 0.0
    %1120 = vmatpush1.msra.mxu0 0.0
    %1121 = vmatprep.subr.mxu0 0.0
    %1122 = vmatpush1.msra.mxu0 0.0
    %1123 = vmatprep.subr.mxu0 0.0
    %1124 = vmatpush1.msra.mxu0 0.0
    %1125 = vmatprep.subr.mxu0 0.0
    %1126 = vmatpush1.msra.mxu0 0.0
    %1127 = vmatprep.subr.mxu0 0.0
    %1128 = vmatpush1.msra.mxu0 0.0
    %1129 = vmatprep.subr.mxu0 0.0
    %1130 = vmatpush1.msra.mxu0 0.0
    %1131 = vmatprep.subr.mxu0 0.0
    %1132 = vmatpush1.msra.mxu0 0.0
    %1133 = vmatprep.subr.mxu0 0.0
    %1134 = vmatpush1.msra.mxu0 0.0
    %1135 = vmatprep.subr.mxu0 0.0
    %1136 = vmatpush1.msra.mxu0 0.0
    %1137 = vmatprep.subr.mxu0 0.0
    %1138 = vmatpush1.msra.mxu0 0.0
    %1139 = vmatprep.subr.mxu0 0.0
    %1140 = vmatpush1.msra.mxu0 0.0
    %1141 = vmatprep.subr.mxu0 0.0
    %1142 = vmatpush1.msra.mxu0 0.0
    %1143 = vmatprep.subr.mxu0 0.0
    %1144 = vmatpush1.msra.mxu0 0.0
    %1145 = vmatprep.mubr.f32.mxu0 0.0
    %1146 = vmatmul.mubr.f32.gmra.mrb[0].mxu0 %v1070
    %v1147 = vpop.f32.mrb[0].mxu0
    %v1148 = vadd.f32 %v1059, %v1147
    %v1149 = vpop.f32.mrb[0].mxu0
    %1150 = vmatprep.mubr.f32.mxu0 0.0
    %1151 = vmatmul.mubr.f32.gmra.mrb[0].mxu0 %v1073
    %v1152 = vpop.f32.mrb[0].mxu0
    %v1153 = vadd.f32 %v1062, %v1152
    %v1154 = vpop.f32.mrb[0].mxu0
    %1155 = vmatprep.mubr.f32.mxu0 0.0
    %1156 = vmatmul.mubr.f32.gmra.mrb[0].mxu0 %v1076
    %v1157 = vpop.f32.mrb[0].mxu0
    %v1158 = vadd.f32 %v1065, %v1157
    %v1159 = vpop.f32.mrb[0].mxu0
    %1160 = vmatprep.mubr.f32.mxu0 0.0
    %1161 = vmatmul.mubr.f32.gmra.mrb[0].mxu0 %v1079
    %v1162 = vpop.f32.mrb[0].mxu0
    %v1163 = vadd.f32 %v1068, %v1162
    %v1164 = vpop.f32.mrb[0].mxu0
    %1165 = vdwg.mxu0
    %v1166 = vlaneseq
    %v1167 = vshrl.u32 %v1166, 7
    %v1168 = vsub.s32 3, %v1167
    %v1169 = vrot.slane %v43, %v1168
    %v1170 = vadd.f32 %v1148, %v1169
    %v1171 = vadd.f32 %v1153, %v1169
    %v1172 = vadd.f32 %v1158, %v1169
    %v1173 = vadd.f32 %v1163, %v1169
    %v1174 = vmax.f32 %v1170, 0.0
    %v1175 = vmax.f32 %v1171, 0.0
    %v1176 = vmax.f32 %v1172, 0.0
    %v1177 = vmax.f32 %v1173, 0.0
    %v1178 = vrsqrt.pop %v1174
    %v1179 = vmul.f32 %v1174, %v1178
    %vm1180 = vcmp.eq.f32.partialorder %v1174, inf
    %v1181 = vsel %vm1180, %v1174, %v1179
    %vm1182 = vcmp.eq.f32.partialorder %v1174, 0.0
    %v1183 = vand.u32 %v1174, 2147483648
    %v1184 = vsel %vm1182, %v1183, %v1181
    %v1185 = vrsqrt.pop %v1175
    %v1186 = vmul.f32 %v1175, %v1185
    %vm1187 = vcmp.eq.f32.partialorder %v1175, inf
    %v1188 = vsel %vm1187, %v1175, %v1186
    %vm1189 = vcmp.eq.f32.partialorder %v1175, 0.0
    %v1190 = vand.u32 %v1175, 2147483648
    %v1191 = vsel %vm1189, %v1190, %v1188
    %v1192 = vrsqrt.pop %v1176
    %v1193 = vmul.f32 %v1176, %v1192
    %vm1194 = vcmp.eq.f32.partialorder %v1176, inf
    %v1195 = vsel %vm1194, %v1176, %v1193
    %vm1196 = vcmp.eq.f32.partialorder %v1176, 0.0
    %v1197 = vand.u32 %v1176, 2147483648
    %v1198 = vsel %vm1196, %v1197, %v1195
    %v1199 = vrsqrt.pop %v1177
    %v1200 = vmul.f32 %v1177, %v1199
    %vm1201 = vcmp.eq.f32.partialorder %v1177, inf
    %v1202 = vsel %vm1201, %v1177, %v1200
    %vm1203 = vcmp.eq.f32.partialorder %v1177, 0.0
    %v1204 = vand.u32 %v1177, 2147483648
    %v1205 = vsel %vm1203, %v1204, %v1202
    %v1206 = vadd.f32 %v916, %v1184
    %v1207 = vadd.f32 %v917, %v1191
    %v1208 = vadd.f32 %v918, %v1198
    %v1209 = vadd.f32 %v919, %v1205
    %vm1210 = vcmask 261120
    %v1211 = vsel %vm1210, %v1206, inf
    %vm1212 = vcmask 253952
    %v1213 = vsel %vm1212, %v1207, inf
    %v1214 = vmin.f32 %v1211, %v1213
    %v1215 = vrot.slane %v1214, 4
    %v1216 = vmin.f32 %v1214, %v1215
    %v1217 = vrot.slane %v1216, 2
    %v1218 = vmin.f32 %v1216, %v1217
    %v1219 = vrot.slane %v1218, 1
    %v1220 = vmin.f32 %v1218, %v1219
    %v1221 = vsel %vm1210, %v1208, inf
    %v1222 = vsel %vm1212, %v1209, inf
    %v1223 = vmin.f32 %v1221, %v1222
    %v1224 = vrot.slane %v1223, 4
    %v1225 = vmin.f32 %v1223, %v1224
    %v1226 = vrot.slane %v1225, 2
    %v1227 = vmin.f32 %v1225, %v1226
    %v1228 = vrot.slane %v1227, 1
    %v1229 = vmin.f32 %v1227, %v1228
    %v1230 = vsel %vm74, %v1220, %v1229
    %vm1231 = vcmask 254976
    %1232 = vst.msk [vmem:[#allocation7] sm:$0x3] %vm1231, %v1230
    // Predicated region
    $region22: #{tpu_custom_call.1} parent=1 // pred_check
      _
    $region23: #{tpu_custom_call.1} parent=1 // pred_check_branch
      %1234 = sbr.rel (0) target = $region25
    $region24: #{tpu_custom_call.1} parent=1 // pred_region
      %s1236 = ssub.s32 32, 32
      %1237 = vsyncadd [#allocation4], %s1236
      %s1239 = sshll.u32 [#allocation7], 4
      %s1240 = int_to_ptr.vmem [resolvable:$true] %s1239
      %1242 = dma.vmem_to_hbm [thread:$0]  %s1240, 32, %s3, [#allocation4]
    $region25: #{tpu_custom_call.1} parent=1 // pred_fallthru
      _
    // Predicated region
    $region26: #{tpu_custom_call.1} parent=1 // pred_check
      _
    $region27: #{tpu_custom_call.1} parent=1 // pred_check_branch
      %1244 = sbr.rel (0) target = $region29
    $region28: #{tpu_custom_call.1} parent=1 // pred_region
      %1245 = dma.done [#allocation4], 32
    $region29: #{tpu_custom_call.1} parent=1 // pred_fallthru
      _
    %1246 = vsyncpa [#allocation3], 1
    %1247 = vsyncpa [#allocation6], 1
    %1248 = vsyncpa [#allocation4], 1

</llo_original>
